<compile_context>
chip_gen: v6e
topology: v6e:2x2x1
jax: 0.10.0
libtpu: 0.0.40
codegen_flags: <defaults>
</compile_context>

<pallas_src>
import functools

import jax
import jax.numpy as jnp
from jax import lax
from jax.experimental import pallas as pl
from jax.experimental.pallas import tpu as pltpu


_LANE = 128
# Conservative activation-tile budget: fits the default scoped VMEM on
# v5e/v6e (128 MiB physical) and v7x (64 MiB physical, 32 MiB default scoped).
_VMEM_ACT_BUDGET = 24 * 1024 * 1024


def _round_up(x, m):
    return ((x + m - 1) // m) * m


# ----------------------------------------------------------------------------
# Fused kernel: Gramba block stand-in + LayerNorm + Linear head
#   hidden = x + (SiLU(x@Win) * (x@Wgate)) @ Wout
#   logits = LN(hidden) @ Whead + b          (Whead lane-padded to CPAD=128)
# ----------------------------------------------------------------------------
def _gramba_head_kernel(x_ref, w_in_ref, w_gate_ref, w_out_ref,
                        gamma_ref, beta_ref, w_head_ref, b_head_ref, o_ref):
    x = x_ref[...].astype(jnp.float32)
    xb = x.astype(jnp.bfloat16)                       # bf16 MXU inputs, f32 accum
    h = jnp.dot(xb, w_in_ref[...], preferred_element_type=jnp.float32)
    g = jnp.dot(xb, w_gate_ref[...], preferred_element_type=jnp.float32)
    mixed = (h * jax.nn.sigmoid(h)) * g               # SiLU(h) * gate
    y = jnp.dot(mixed.astype(jnp.bfloat16), w_out_ref[...],
                preferred_element_type=jnp.float32)
    hidden = x + y                                    # residual (stays in VMEM)

    # LayerNorm (eps=1e-5, affine), fused -- no HBM round-trip of `hidden`.
    mu = jnp.mean(hidden, axis=-1, keepdims=True)
    xc = hidden - mu
    var = jnp.mean(xc * xc, axis=-1, keepdims=True)
    normed = xc * lax.rsqrt(var + 1e-5) * gamma_ref[...] + beta_ref[...]

    # Head, lane-padded to CPAD (=128) so the store is a full-lane vst.
    logits = jnp.dot(normed.astype(jnp.bfloat16), w_head_ref[...],
                     preferred_element_type=jnp.float32) + b_head_ref[...]
    o_ref[...] = logits.astype(o_ref.dtype)


def _choose_tm(n, d, hdim, cpad, max_tm=512):
    """Biggest row tile that keeps activation tiles under the VMEM budget and
    still leaves >= 2 grid steps (v7x has 2 TensorCores sharing parallel axes)."""
    per_row_bytes = 4 * (4 * d + 3 * hdim + 2 * cpad)   # f32 temps + dbl-buffered IO
    tm = _LANE
    while (tm < max_tm
           and 2 * tm * per_row_bytes <= _VMEM_ACT_BUDGET
           and pl.cdiv(n, 2 * tm) >= 2):
        tm *= 2
    return tm


def gramba_head_fused(x2d, w_in, w_gate, w_out, gamma, beta,
                      w_head_pad, b_head_pad):
    n, d = x2d.shape
    hdim = w_in.shape[1]
    cpad = w_head_pad.shape[1]
    tm = _choose_tm(n, d, hdim, cpad)

    n_pad = _round_up(n, tm)
    if n_pad != n:                      # ragged tail: pad rows (sliced off later)
        x2d = jnp.pad(x2d, ((0, n_pad - n), (0, 0)))

    return pl.pallas_call(
        _gramba_head_kernel,
        out_shape=jax.ShapeDtypeStruct((n_pad, cpad), jnp.float32),
        grid=(n_pad // tm,),
        in_specs=[
            pl.BlockSpec((tm, d), lambda i: (i, 0)),
            pl.BlockSpec((d, hdim), lambda i: (0, 0)),
            pl.BlockSpec((d, hdim), lambda i: (0, 0)),
            pl.BlockSpec((hdim, d), lambda i: (0, 0)),
            pl.BlockSpec((1, d), lambda i: (0, 0)),
            pl.BlockSpec((1, d), lambda i: (0, 0)),
            pl.BlockSpec((d, cpad), lambda i: (0, 0)),
            pl.BlockSpec((1, cpad), lambda i: (0, 0)),
        ],
        out_specs=pl.BlockSpec((tm, cpad), lambda i: (i, 0)),
        compiler_params=pltpu.CompilerParams(
            dimension_semantics=("parallel",)),
    )(x2d, w_in, w_gate, w_out, gamma, beta, w_head_pad, b_head_pad)


# ----------------------------------------------------------------------------
# Loss kernel: CE(start) + CE(end), masked positions filled with -inf, mean
# over batch.  Consumes the lane-padded logits slab [B, T, CPAD] directly and
# selects the two real classes with a lane mask (no strided channel gathers).
# Tiled over batch; accumulates into an SMEM scalar.
# ----------------------------------------------------------------------------
def _squad_loss_kernel(logits_ref, tgt_ref, mask_ref, loss_ref, *,
                       inv_b, num_classes):
    bi = pl.program_id(0)

    @pl.when(bi == 0)
    def _init():
        loss_ref[0, 0] = 0.0

    lg = logits_ref[...]                               # (tb, T, CPAD) f32
    tb, t, cpad = lg.shape
    masked = mask_ref[...] > 0.5                       # (tb, T, 1) bool
    z = jnp.where(masked, jnp.float32(-jnp.inf), lg)   # broadcast over lanes

    # log-sum-exp over the sequence axis.
    m = jnp.max(z, axis=1, keepdims=True)              # (tb, 1, CPAD)
    lse = m + jnp.log(jnp.sum(jnp.exp(z - m), axis=1, keepdims=True))

    # picked logit at each (example, class) target position.
    tpos = lax.broadcasted_iota(jnp.int32, (tb, t, cpad), 1)
    sel = tpos == tgt_ref[...]                         # vs (tb, 1, CPAD)
    picked = jnp.sum(jnp.where(sel, z, 0.0), axis=1, keepdims=True)

    ce = lse - picked                                  # (tb, 1, CPAD)
    chan = lax.broadcasted_iota(jnp.int32, (tb, 1, cpad), 2)
    contrib = jnp.sum(jnp.where(chan < num_classes, ce, 0.0))
    loss_ref[0, 0] += contrib * inv_b


def squad_loss(logits3, targets3, mask3, *, num_classes):
    b, t, cpad = logits3.shape
    tb = 8 if b % 8 == 0 else b
    kernel = functools.partial(_squad_loss_kernel,
                               inv_b=1.0 / b, num_classes=num_classes)
    out = pl.pallas_call(
        kernel,
        out_shape=jax.ShapeDtypeStruct((1, 1), jnp.float32),
        grid=(b // tb,),
        in_specs=[
            pl.BlockSpec((tb, t, cpad), lambda i: (i, 0, 0)),
            pl.BlockSpec((tb, 1, cpad), lambda i: (i, 0, 0)),
            pl.BlockSpec((tb, t, 1), lambda i: (i, 0, 0)),
        ],
        out_specs=pl.BlockSpec((1, 1), lambda i: (0, 0),
                               memory_space=pltpu.SMEM),
        compiler_params=pltpu.CompilerParams(
            dimension_semantics=("arbitrary",)),
    )(logits3, targets3, mask3)
    return out[0, 0]


# ----------------------------------------------------------------------------
# Model wrapper
# ----------------------------------------------------------------------------
def init_params(key, d, hdim, c):
    ks = jax.random.split(key, 5)
    scale_d = 1.0 / jnp.sqrt(d)
    scale_h = 1.0 / jnp.sqrt(hdim)
    return {
        "w_in":     jax.random.normal(ks[0], (d, hdim), jnp.float32) * scale_d,
        "w_gate":   jax.random.normal(ks[1], (d, hdim), jnp.float32) * scale_d,
        "w_out":    jax.random.normal(ks[2], (hdim, d), jnp.float32) * scale_h,
        "ln_gamma": jnp.ones((1, d), jnp.float32),
        "ln_beta":  jnp.zeros((1, d), jnp.float32),
        "w_head":   jax.random.normal(ks[3], (d, c), jnp.float32) * scale_d,
        "b_head":   jax.random.normal(ks[4], (1, c), jnp.float32) * 0.01,
    }


def gramba_squad_forward(params, x, targets=None, attention_mask=None):
    """x: [B, T, D] f32; targets: [B, 2] int; attention_mask: [B, T] bool
    (True = masked out).  Returns (logits [B, T, C], loss scalar or None)."""
    b, t, d = x.shape
    c = params["w_head"].shape[1]
    hdim = params["w_in"].shape[1]
    assert d % _LANE == 0 and hdim % _LANE == 0, (
        "embedding/hidden dims must be multiples of 128 for full-lane matmuls")
    # TODO(synk): for dims that are not 128-multiples, zero-pad weights and
    # normalize over the real D inside the kernel.
    cpad = _round_up(max(c, _LANE), _LANE)

    # bf16 weights (half the HBM/VMEM traffic); head lane-padded to CPAD.
    w_in = params["w_in"].astype(jnp.bfloat16)
    w_gate = params["w_gate"].astype(jnp.bfloat16)
    w_out = params["w_out"].astype(jnp.bfloat16)
    w_head_pad = jnp.zeros((d, cpad), jnp.bfloat16).at[:, :c].set(
        params["w_head"].astype(jnp.bfloat16))
    b_head_pad = jnp.zeros((1, cpad), jnp.float32).at[:, :c].set(
        params["b_head"])

    n = b * t
    logits_pad = gramba_head_fused(
        x.reshape(n, d), w_in, w_gate, w_out,
        params["ln_gamma"], params["ln_beta"], w_head_pad, b_head_pad)

    logits = logits_pad[:n, :c].reshape(b, t, c)

    loss = None
    if targets is not None:
        mask = (attention_mask if attention_mask is not None
                else jnp.zeros((b, t), bool))
        mask3 = mask.astype(jnp.float32).reshape(b, t, 1)
        tgt3 = jnp.zeros((b, 1, cpad), jnp.int32).at[:, 0, :c].set(
            targets.astype(jnp.int32))
        logits3 = logits_pad[:n].reshape(b, t, cpad)
        loss = squad_loss(logits3, tgt3, mask3, num_classes=c)
    return logits, loss


if __name__ == "__main__":
    B, T, D, H, C = 2, 128, 128, 256, 2

    key = jax.random.PRNGKey(0)
    k_p, k_x, k_t = jax.random.split(key, 3)

    params = init_params(k_p, D, H, C)
    x = jax.random.normal(k_x, (B, T, D), jnp.float32)
    # last 16 positions are padding (masked out -> True)
    attention_mask = jnp.concatenate(
        [jnp.zeros((B, T - 16), bool), jnp.ones((B, 16), bool)], axis=1)
    targets = jax.random.randint(k_t, (B, 2), 0, T - 16, jnp.int32)

    logits, loss = gramba_squad_forward(params, x, targets, attention_mask)
    jax.block_until_ready((logits, loss))

    assert logits.shape == (B, T, C)
    assert loss.shape == ()
    assert bool(jnp.isfinite(loss))
    print("KERNEL_OK")
</pallas_src>

<mosaic_0001>
module attributes {stable_mosaic.version = 11 : i64} {
  func.func @_gramba_head_kernel(%arg0: i32, %arg1: memref<128x128xf32, #tpu.memory_space<vmem>>, %arg2: memref<128x256xbf16, #tpu.memory_space<vmem>>, %arg3: memref<128x256xbf16, #tpu.memory_space<vmem>>, %arg4: memref<256x128xbf16, #tpu.memory_space<vmem>>, %arg5: memref<1x128xf32, #tpu.memory_space<vmem>>, %arg6: memref<1x128xf32, #tpu.memory_space<vmem>>, %arg7: memref<128x128xbf16, #tpu.memory_space<vmem>>, %arg8: memref<1x128xf32, #tpu.memory_space<vmem>>, %arg9: memref<128x128xf32, #tpu.memory_space<vmem>>) attributes {dimension_semantics = [#tpu.dimension_semantics<parallel>], iteration_bounds = array<i64: 2>, scalar_prefetch = 0 : i64, scratch_operands = 0 : i64, tpu.core_type = #tpu.core_type<tc>, window_params = [{transform_indices = @transform_0, window_bounds = array<i64: 128, 128>}, {pipeline_mode = #tpu.pipeline_mode<synchronous>, transform_indices = @transform_1, window_bounds = array<i64: 128, 256>}, {pipeline_mode = #tpu.pipeline_mode<synchronous>, transform_indices = @transform_2, window_bounds = array<i64: 128, 256>}, {pipeline_mode = #tpu.pipeline_mode<synchronous>, transform_indices = @transform_3, window_bounds = array<i64: 256, 128>}, {pipeline_mode = #tpu.pipeline_mode<synchronous>, transform_indices = @transform_4, window_bounds = array<i64: 1, 128>}, {pipeline_mode = #tpu.pipeline_mode<synchronous>, transform_indices = @transform_5, window_bounds = array<i64: 1, 128>}, {pipeline_mode = #tpu.pipeline_mode<synchronous>, transform_indices = @transform_6, window_bounds = array<i64: 128, 128>}, {pipeline_mode = #tpu.pipeline_mode<synchronous>, transform_indices = @transform_7, window_bounds = array<i64: 1, 128>}, {transform_indices = @transform_8, window_bounds = array<i64: 128, 128>}]} {
    %c0 = arith.constant 0 : index
    %c0_0 = arith.constant 0 : index
    %0 = vector.load %arg1[%c0, %c0_0] : memref<128x128xf32, #tpu.memory_space<vmem>>, vector<128x128xf32>
    %1 = arith.truncf %0 : vector<128x128xf32> to vector<128x128xbf16>
    %c0_1 = arith.constant 0 : index
    %c0_2 = arith.constant 0 : index
    %2 = vector.load %arg2[%c0_1, %c0_2] : memref<128x256xbf16, #tpu.memory_space<vmem>>, vector<128x256xbf16>
    %cst = arith.constant dense<0.000000e+00> : vector<128x256xf32>
    %3 = tpu.matmul %1, %2, %cst {dimension_numbers = #tpu.dot_dimension_numbers<[1], [0], [0], [1], [0, 0, 1, 1], [], []>} : vector<128x128xbf16>, vector<128x256xbf16>, vector<128x256xf32> -> vector<128x256xf32>
    %c0_3 = arith.constant 0 : index
    %c0_4 = arith.constant 0 : index
    %4 = vector.load %arg3[%c0_3, %c0_4] : memref<128x256xbf16, #tpu.memory_space<vmem>>, vector<128x256xbf16>
    %cst_5 = arith.constant dense<0.000000e+00> : vector<128x256xf32>
    %5 = tpu.matmul %1, %4, %cst_5 {dimension_numbers = #tpu.dot_dimension_numbers<[1], [0], [0], [1], [0, 0, 1, 1], [], []>} : vector<128x128xbf16>, vector<128x256xbf16>, vector<128x256xf32> -> vector<128x256xf32>
    %6 = arith.negf %3 : vector<128x256xf32>
    %7 = math.exp %6 : vector<128x256xf32>
    %cst_6 = arith.constant 1.000000e+00 : f32
    %8 = vector.broadcast %cst_6 : f32 to vector<128x256xf32>
    %9 = arith.addf %8, %7 : vector<128x256xf32>
    %10 = arith.divf %8, %9 : vector<128x256xf32>
    %11 = arith.mulf %3, %10 : vector<128x256xf32>
    %12 = arith.mulf %11, %5 : vector<128x256xf32>
    %13 = arith.truncf %12 : vector<128x256xf32> to vector<128x256xbf16>
    %c0_7 = arith.constant 0 : index
    %c0_8 = arith.constant 0 : index
    %14 = vector.load %arg4[%c0_7, %c0_8] : memref<256x128xbf16, #tpu.memory_space<vmem>>, vector<256x128xbf16>
    %cst_9 = arith.constant dense<0.000000e+00> : vector<128x128xf32>
    %15 = tpu.matmul %13, %14, %cst_9 {dimension_numbers = #tpu.dot_dimension_numbers<[1], [0], [0], [1], [0, 0, 1, 1], [], []>} : vector<128x256xbf16>, vector<256x128xbf16>, vector<128x128xf32> -> vector<128x128xf32>
    %16 = arith.addf %0, %15 : vector<128x128xf32>
    %cst_10 = arith.constant dense<0.000000e+00> : vector<128xf32>
    %17 = vector.multi_reduction <add>, %16, %cst_10 [1] : vector<128x128xf32> to vector<128xf32>
    %18 = vector.shape_cast %17 : vector<128xf32> to vector<128x1xf32>
    %cst_11 = arith.constant 1.280000e+02 : f32
    %19 = vector.broadcast %cst_11 : f32 to vector<128x1xf32>
    %20 = arith.divf %18, %19 : vector<128x1xf32>
    %21 = vector.broadcast %20 : vector<128x1xf32> to vector<128x128xf32>
    %22 = arith.subf %16, %21 : vector<128x128xf32>
    %23 = arith.mulf %22, %22 : vector<128x128xf32>
    %cst_12 = arith.constant dense<0.000000e+00> : vector<128xf32>
    %24 = vector.multi_reduction <add>, %23, %cst_12 [1] : vector<128x128xf32> to vector<128xf32>
    %25 = vector.shape_cast %24 : vector<128xf32> to vector<128x1xf32>
    %cst_13 = arith.constant 1.280000e+02 : f32
    %26 = vector.broadcast %cst_13 : f32 to vector<128x1xf32>
    %27 = arith.divf %25, %26 : vector<128x1xf32>
    %cst_14 = arith.constant 9.99999974E-6 : f32
    %28 = vector.broadcast %cst_14 : f32 to vector<128x1xf32>
    %29 = arith.addf %27, %28 : vector<128x1xf32>
    %30 = math.rsqrt %29 : vector<128x1xf32>
    %31 = vector.broadcast %30 : vector<128x1xf32> to vector<128x128xf32>
    %32 = arith.mulf %22, %31 : vector<128x128xf32>
    %c0_15 = arith.constant 0 : index
    %c0_16 = arith.constant 0 : index
    %33 = vector.load %arg5[%c0_15, %c0_16] : memref<1x128xf32, #tpu.memory_space<vmem>>, vector<1x128xf32>
    %34 = vector.broadcast %33 : vector<1x128xf32> to vector<128x128xf32>
    %35 = arith.mulf %32, %34 : vector<128x128xf32>
    %c0_17 = arith.constant 0 : index
    %c0_18 = arith.constant 0 : index
    %36 = vector.load %arg6[%c0_17, %c0_18] : memref<1x128xf32, #tpu.memory_space<vmem>>, vector<1x128xf32>
    %37 = vector.broadcast %36 : vector<1x128xf32> to vector<128x128xf32>
    %38 = arith.addf %35, %37 : vector<128x128xf32>
    %39 = arith.truncf %38 : vector<128x128xf32> to vector<128x128xbf16>
    %c0_19 = arith.constant 0 : index
    %c0_20 = arith.constant 0 : index
    %40 = vector.load %arg7[%c0_19, %c0_20] : memref<128x128xbf16, #tpu.memory_space<vmem>>, vector<128x128xbf16>
    %cst_21 = arith.constant dense<0.000000e+00> : vector<128x128xf32>
    %41 = tpu.matmul %39, %40, %cst_21 {dimension_numbers = #tpu.dot_dimension_numbers<[1], [0], [0], [1], [0, 0, 1, 1], [], []>} : vector<128x128xbf16>, vector<128x128xbf16>, vector<128x128xf32> -> vector<128x128xf32>
    %c0_22 = arith.constant 0 : index
    %c0_23 = arith.constant 0 : index
    %42 = vector.load %arg8[%c0_22, %c0_23] : memref<1x128xf32, #tpu.memory_space<vmem>>, vector<1x128xf32>
    %43 = vector.broadcast %42 : vector<1x128xf32> to vector<128x128xf32>
    %44 = arith.addf %41, %43 : vector<128x128xf32>
    %c0_24 = arith.constant 0 : index
    %c0_25 = arith.constant 0 : index
    %45 = vector.load %arg9[%c0_24, %c0_25] : memref<128x128xf32, #tpu.memory_space<vmem>>, vector<128x128xf32>
    tpu.vector_store %arg9[%c0_24, %c0_25], %44 {strides = array<i32>} : memref<128x128xf32, #tpu.memory_space<vmem>>, vector<128x128xf32>,
    return
  }
  func.func @transform_0(%arg0: i32) -> (i32, i32) {
    %c0_i32 = arith.constant 0 : i32
    %c0_i32_0 = arith.constant 0 : i32
    return %arg0, %c0_i32 : i32, i32
  }
  func.func @transform_1(%arg0: i32) -> (i32, i32) {
    %c0_i32 = arith.constant 0 : i32
    %c0_i32_0 = arith.constant 0 : i32
    %c0_i32_1 = arith.constant 0 : i32
    return %c0_i32, %c0_i32_0 : i32, i32
  }
  func.func @transform_2(%arg0: i32) -> (i32, i32) {
    %c0_i32 = arith.constant 0 : i32
    %c0_i32_0 = arith.constant 0 : i32
    %c0_i32_1 = arith.constant 0 : i32
    return %c0_i32, %c0_i32_0 : i32, i32
  }
  func.func @transform_3(%arg0: i32) -> (i32, i32) {
    %c0_i32 = arith.constant 0 : i32
    %c0_i32_0 = arith.constant 0 : i32
    %c0_i32_1 = arith.constant 0 : i32
    return %c0_i32, %c0_i32_0 : i32, i32
  }
  func.func @transform_4(%arg0: i32) -> (i32, i32) {
    %c0_i32 = arith.constant 0 : i32
    %c0_i32_0 = arith.constant 0 : i32
    %c0_i32_1 = arith.constant 0 : i32
    return %c0_i32, %c0_i32_0 : i32, i32
  }
  func.func @transform_5(%arg0: i32) -> (i32, i32) {
    %c0_i32 = arith.constant 0 : i32
    %c0_i32_0 = arith.constant 0 : i32
    %c0_i32_1 = arith.constant 0 : i32
    return %c0_i32, %c0_i32_0 : i32, i32
  }
  func.func @transform_6(%arg0: i32) -> (i32, i32) {
    %c0_i32 = arith.constant 0 : i32
    %c0_i32_0 = arith.constant 0 : i32
    %c0_i32_1 = arith.constant 0 : i32
    return %c0_i32, %c0_i32_0 : i32, i32
  }
  func.func @transform_7(%arg0: i32) -> (i32, i32) {
    %c0_i32 = arith.constant 0 : i32
    %c0_i32_0 = arith.constant 0 : i32
    %c0_i32_1 = arith.constant 0 : i32
    return %c0_i32, %c0_i32_0 : i32, i32
  }
  func.func @transform_8(%arg0: i32) -> (i32, i32) {
    %c0_i32 = arith.constant 0 : i32
    %c0_i32_0 = arith.constant 0 : i32
    return %arg0, %c0_i32 : i32, i32
  }
}

</mosaic_0001>

<llo_original>
// kernel: tpu_custom_call.1
$region0: #{tpu_custom_call.1}
  #allocation0 [shape = 'u32[]', space=smem, size = 0x4, offset = 0x4, fixed_abs, tag = 'smem constant byte address 0x4 - core index']
  #allocation1 [shape = 'u32[144,128]{1,0:T(1,128)}', space=vmem, size = 0x12000, scoped, tag = 'internal scratch']
  %s0 = inlined_call_operand.hbm [shape: f32[256,128], index: 0, kind: input, shape index: {}]
  %s1 = inlined_call_operand.hbm [shape: bf16[128,256], index: 1, kind: input, shape index: {}]
  %s2 = inlined_call_operand.hbm [shape: bf16[128,256], index: 2, kind: input, shape index: {}]
  %s3 = inlined_call_operand.hbm [shape: bf16[256,128], index: 3, kind: input, shape index: {}]
  %s4 = inlined_call_operand.vmem [shape: f32[1,128], index: 4, kind: input, shape index: {}]
  %s5 = inlined_call_operand.vmem [shape: f32[1,128], index: 5, kind: input, shape index: {}]
  %s6 = inlined_call_operand.hbm [shape: bf16[128,128], index: 6, kind: input, shape index: {}]
  %s7 = inlined_call_operand.vmem [shape: f32[1,128], index: 7, kind: input, shape index: {}]
  %s8 = inlined_call_operand.hbm [shape: f32[256,128], index: 8, kind: output, shape index: {}]
  %s9 = sld [smem:[#allocation0]]
  $region85: #{tpu_custom_call.1} parent=0
    _
  %s11 = ssub.s32 1, %s9
  %s12 = scalar_select 0, %s11, %s9
  $region1: #{tpu_custom_call.1} parent=0
    #allocation2 [shape = 'u8[131072]{0}', space=vmem, size = 0x20000, scoped, tag = 'input window, operand 0']
    #allocation3 [shape = 's32[2]{0}', space=sflag, size = 0x8, scoped, tag = 'scoped memory for tpu_custom_call.1']
    #allocation4 [shape = 's32[2]{0}', space=sflag, size = 0x8, scoped, tag = 'scoped memory for tpu_custom_call.1']
    #allocation5 [shape = 'u8[65536]{0}', space=vmem, size = 0x10000, scoped, tag = 'input window, operand 1, single buffered']
    #allocation6 [shape = 's32[1]{0}', space=sflag, size = 0x4, scoped, tag = 'scoped memory for tpu_custom_call.1']
    #allocation7 [shape = 'u8[65536]{0}', space=vmem, size = 0x10000, scoped, tag = 'input window, operand 2, single buffered']
    #allocation8 [shape = 'u8[65536]{0}', space=vmem, size = 0x10000, scoped, tag = 'input window, operand 3, single buffered']
    #allocation9 [shape = 's32[1]{0}', space=sflag, size = 0x4, scoped, tag = 'scoped memory for tpu_custom_call.1']
    #allocation10 [shape = 'u8[32768]{0}', space=vmem, size = 0x8000, scoped, tag = 'input window, operand 6, single buffered']
    #allocation11 [shape = 'u8[131072]{0}', space=vmem, size = 0x20000, scoped, tag = 'output window, operand 0']
    %13 = vsyncpa [#allocation3], 0
    %s14 = scalar_lea.sflag [#allocation3], 1
    %15 = vsyncpa %s14, 0
    %16 = vsyncpa [#allocation6], 0
    %17 = vsyncpa [#allocation9], 0
    %18 = vsyncpa [#allocation4], 0
    %s19 = scalar_lea.sflag [#allocation4], 1
    %20 = vsyncpa %s19, 0
    loop: start=0, step=1, limit=4
    $region2: #{tpu_custom_call.1} parent=1 // loop_pre_header
      _
    $region3: #{tpu_custom_call.1} parent=1 // loop_header
      %s22 = sphi 0, %s26
      %p23 = scmp.ge.s32.totalorder %s22, 4
      %s32 = sphi 0, %s34
      %s35 = sphi 0, %s32
      %s36 = sphi 0, %s35
      %s52 = sphi 0, %s36
      %s56 = sphi 0, %s56
      %s58 = sphi 0, %s56
      %s59 = sphi 0, %s58
      %s73 = sphi 0, %s59
      %s77 = sphi 0, %s77
      %s79 = sphi 0, %s77
      %s80 = sphi 0, %s79
      %s94 = sphi 0, %s80
      %s98 = sphi 0, %s98
      %s100 = sphi 0, %s98
      %s101 = sphi 0, %s100
      %s115 = sphi 0, %s101
      %s119 = sphi 0, %s119
      %s121 = sphi 0, %s119
      %s122 = sphi 0, %s121
      %s136 = sphi 0, %s122
      %s140 = sphi 0, %s140
      %s142 = sphi 0, %s140
      %s143 = sphi 0, %s142
      %s157 = sphi 0, %s143
      %s161 = sphi 0, %s161
      %s163 = sphi 0, %s161
      %s164 = sphi 0, %s163
      %s178 = sphi 0, %s164
      %s182 = sphi 0, %s182
      %s184 = sphi 0, %s182
      %s185 = sphi 0, %s184
      %s199 = sphi 0, %s185
      %s205 = sphi 0, %s207
      %s208 = sphi 0, %s205
      %s209 = sphi 0, %s208
      %s225 = sphi 0, %s209
    $region4: #{tpu_custom_call.1} parent=1 // loop_header_branch
      %25 = sbr.rel (%p23) target = $region8
    $region5: #{tpu_custom_call.1} parent=1 // loop_body
      %s27 = ssub.s32 %s22, 1
      %s28 = ssub.s32 %s22, 2
      %s29 = sadd.s32 %s22, 1
      %s30 = ssub.s32 %s22, %s29
      %p31 = scmp.eq.s32.totalorder %s30, 0
      %s33 = sadd.s32 %s32, 1
      %s34 = scalar_select %p31, %s32, %s33
      %p37 = pneg %p31
      %p38 = scmp.eq.s32.totalorder %s22, 1
      %p39 = por %p37, %p38
      %p40 = scmp.ne.s32.totalorder %s32, %s35
      %p41 = scmp.eq.s32.totalorder %s22, 0
      %p42 = por %p40, %p41
      %p43 = scmp.ne.s32.totalorder %s32, %s35
      %p44 = scmp.eq.s32.totalorder %s27, 1
      %p45 = por %p43, %p44
      %p46 = scmp.ne.s32.totalorder %s35, %s36
      %p47 = scmp.eq.s32.totalorder %s27, 0
      %p48 = por %p46, %p47
      %p49 = scmp.ne.s32.totalorder %s35, %s36
      %p50 = scmp.eq.s32.totalorder %s28, 1
      %p51 = por %p49, %p50
      %p53 = scmp.ne.s32.totalorder %s36, %s52
      %p54 = scmp.eq.s32.totalorder %s28, 0
      %p55 = por %p53, %p54
      %s57 = sadd.s32 %s56, 1
      %p60 = scmp.eq.s32.totalorder %s22, 1
      %p61 = scmp.ne.s32.totalorder %s56, %s58
      %p62 = scmp.eq.s32.totalorder %s22, 0
      %p63 = por %p61, %p62
      %p64 = scmp.ne.s32.totalorder %s56, %s58
      %p65 = scmp.eq.s32.totalorder %s27, 1
      %p66 = por %p64, %p65
      %p67 = scmp.ne.s32.totalorder %s58, %s59
      %p68 = scmp.eq.s32.totalorder %s27, 0
      %p69 = por %p67, %p68
      %p70 = scmp.ne.s32.totalorder %s58, %s59
      %p71 = scmp.eq.s32.totalorder %s28, 1
      %p72 = por %p70, %p71
      %p74 = scmp.ne.s32.totalorder %s59, %s73
      %p75 = scmp.eq.s32.totalorder %s28, 0
      %p76 = por %p74, %p75
      %s78 = sadd.s32 %s77, 1
      %p81 = scmp.eq.s32.totalorder %s22, 1
      %p82 = scmp.ne.s32.totalorder %s77, %s79
      %p83 = scmp.eq.s32.totalorder %s22, 0
      %p84 = por %p82, %p83
      %p85 = scmp.ne.s32.totalorder %s77, %s79
      %p86 = scmp.eq.s32.totalorder %s27, 1
      %p87 = por %p85, %p86
      %p88 = scmp.ne.s32.totalorder %s79, %s80
      %p89 = scmp.eq.s32.totalorder %s27, 0
      %p90 = por %p88, %p89
      %p91 = scmp.ne.s32.totalorder %s79, %s80
      %p92 = scmp.eq.s32.totalorder %s28, 1
      %p93 = por %p91, %p92
      %p95 = scmp.ne.s32.totalorder %s80, %s94
      %p96 = scmp.eq.s32.totalorder %s28, 0
      %p97 = por %p95, %p96
      %s99 = sadd.s32 %s98, 1
      %p102 = scmp.eq.s32.totalorder %s22, 1
      %p103 = scmp.ne.s32.totalorder %s98, %s100
      %p104 = scmp.eq.s32.totalorder %s22, 0
      %p105 = por %p103, %p104
      %p106 = scmp.ne.s32.totalorder %s98, %s100
      %p107 = scmp.eq.s32.totalorder %s27, 1
      %p108 = por %p106, %p107
      %p109 = scmp.ne.s32.totalorder %s100, %s101
      %p110 = scmp.eq.s32.totalorder %s27, 0
      %p111 = por %p109, %p110
      %p112 = scmp.ne.s32.totalorder %s100, %s101
      %p113 = scmp.eq.s32.totalorder %s28, 1
      %p114 = por %p112, %p113
      %p116 = scmp.ne.s32.totalorder %s101, %s115
      %p117 = scmp.eq.s32.totalorder %s28, 0
      %p118 = por %p116, %p117
      %s120 = sadd.s32 %s119, 1
      %p123 = scmp.eq.s32.totalorder %s22, 1
      %p124 = scmp.ne.s32.totalorder %s119, %s121
      %p125 = scmp.eq.s32.totalorder %s22, 0
      %p126 = por %p124, %p125
      %p127 = scmp.ne.s32.totalorder %s119, %s121
      %p128 = scmp.eq.s32.totalorder %s27, 1
      %p129 = por %p127, %p128
      %p130 = scmp.ne.s32.totalorder %s121, %s122
      %p131 = scmp.eq.s32.totalorder %s27, 0
      %p132 = por %p130, %p131
      %p133 = scmp.ne.s32.totalorder %s121, %s122
      %p134 = scmp.eq.s32.totalorder %s28, 1
      %p135 = por %p133, %p134
      %p137 = scmp.ne.s32.totalorder %s122, %s136
      %p138 = scmp.eq.s32.totalorder %s28, 0
      %p139 = por %p137, %p138
      %s141 = sadd.s32 %s140, 1
      %p144 = scmp.eq.s32.totalorder %s22, 1
      %p145 = scmp.ne.s32.totalorder %s140, %s142
      %p146 = scmp.eq.s32.totalorder %s22, 0
      %p147 = por %p145, %p146
      %p148 = scmp.ne.s32.totalorder %s140, %s142
      %p149 = scmp.eq.s32.totalorder %s27, 1
      %p150 = por %p148, %p149
      %p151 = scmp.ne.s32.totalorder %s142, %s143
      %p152 = scmp.eq.s32.totalorder %s27, 0
      %p153 = por %p151, %p152
      %p154 = scmp.ne.s32.totalorder %s142, %s143
      %p155 = scmp.eq.s32.totalorder %s28, 1
      %p156 = por %p154, %p155
      %p158 = scmp.ne.s32.totalorder %s143, %s157
      %p159 = scmp.eq.s32.totalorder %s28, 0
      %p160 = por %p158, %p159
      %s162 = sadd.s32 %s161, 1
      %p165 = scmp.eq.s32.totalorder %s22, 1
      %p166 = scmp.ne.s32.totalorder %s161, %s163
      %p167 = scmp.eq.s32.totalorder %s22, 0
      %p168 = por %p166, %p167
      %p169 = scmp.ne.s32.totalorder %s161, %s163
      %p170 = scmp.eq.s32.totalorder %s27, 1
      %p171 = por %p169, %p170
      %p172 = scmp.ne.s32.totalorder %s163, %s164
      %p173 = scmp.eq.s32.totalorder %s27, 0
      %p174 = por %p172, %p173
      %p175 = scmp.ne.s32.totalorder %s163, %s164
      %p176 = scmp.eq.s32.totalorder %s28, 1
      %p177 = por %p175, %p176
      %p179 = scmp.ne.s32.totalorder %s164, %s178
      %p180 = scmp.eq.s32.totalorder %s28, 0
      %p181 = por %p179, %p180
      %s183 = sadd.s32 %s182, 1
      %p186 = scmp.eq.s32.totalorder %s22, 1
      %p187 = scmp.ne.s32.totalorder %s182, %s184
      %p188 = scmp.eq.s32.totalorder %s22, 0
      %p189 = por %p187, %p188
      %p190 = scmp.ne.s32.totalorder %s182, %s184
      %p191 = scmp.eq.s32.totalorder %s27, 1
      %p192 = por %p190, %p191
      %p193 = scmp.ne.s32.totalorder %s184, %s185
      %p194 = scmp.eq.s32.totalorder %s27, 0
      %p195 = por %p193, %p194
      %p196 = scmp.ne.s32.totalorder %s184, %s185
      %p197 = scmp.eq.s32.totalorder %s28, 1
      %p198 = por %p196, %p197
      %p200 = scmp.ne.s32.totalorder %s185, %s199
      %p201 = scmp.eq.s32.totalorder %s28, 0
      %p202 = por %p200, %p201
      %s203 = ssub.s32 %s22, %s29
      %p204 = scmp.eq.s32.totalorder %s203, 0
      %s206 = sadd.s32 %s205, 1
      %s207 = scalar_select %p204, %s205, %s206
      %p210 = pneg %p204
      %p211 = scmp.eq.s32.totalorder %s22, 1
      %p212 = por %p210, %p211
      %p213 = scmp.ne.s32.totalorder %s205, %s208
      %p214 = scmp.eq.s32.totalorder %s22, 0
      %p215 = por %p213, %p214
      %p216 = scmp.ne.s32.totalorder %s205, %s208
      %p217 = scmp.eq.s32.totalorder %s27, 1
      %p218 = por %p216, %p217
      %p219 = scmp.ne.s32.totalorder %s208, %s209
      %p220 = scmp.eq.s32.totalorder %s27, 0
      %p221 = por %p219, %p220
      %p222 = scmp.ne.s32.totalorder %s208, %s209
      %p223 = scmp.eq.s32.totalorder %s28, 1
      %p224 = por %p222, %p223
      %p226 = scmp.ne.s32.totalorder %s209, %s225
      %p227 = scmp.eq.s32.totalorder %s28, 0
      %p228 = por %p226, %p227
      %p229 = scmp.le.s32.totalorder 1, %s22
      %p230 = scmp.lt.s32.totalorder %s22, 3
      %p231 = pnand %p229, %p230
      %p232 = pneg %p231
      // Predicated region
      $region9: #{tpu_custom_call.1} parent=5 // pred_check
        _
      $region10: #{tpu_custom_call.1} parent=5 // pred_check_branch
        %234 = sbr.rel (%p231) target = $region12
      $region11: #{tpu_custom_call.1} parent=5 // pred_region
        %s235 = ssub.s32 %s22, 1
        // Predicated region
        $region13: #{tpu_custom_call.1} parent=11 // pred_check
          %p236 = pneg %p69
        $region14: #{tpu_custom_call.1} parent=11 // pred_check_branch
          %238 = sbr.rel (%p236) target = $region16
        $region15: #{tpu_custom_call.1} parent=11 // pred_region
          %s240 = ssub.s32 2048, 2048
          %241 = vsyncadd [#allocation6], %s240
          %s242 = sshll.u32 [#allocation5], 4
          %s243 = int_to_ptr.vmem [resolvable:$true] %s242
          %248 = dma.hbm_to_vmem [thread:$0]  %s1, 2048, %s243, [#allocation6], 128, 128, 8
        $region16: #{tpu_custom_call.1} parent=11 // pred_fallthru
          _
        // Predicated region
        $region17: #{tpu_custom_call.1} parent=11 // pred_check
          %p249 = pneg %p90
        $region18: #{tpu_custom_call.1} parent=11 // pred_check_branch
          %251 = sbr.rel (%p249) target = $region20
        $region19: #{tpu_custom_call.1} parent=11 // pred_region
          %s253 = ssub.s32 2048, 2048
          %254 = vsyncadd [#allocation6], %s253
          %s255 = sshll.u32 [#allocation7], 4
          %s256 = int_to_ptr.vmem [resolvable:$true] %s255
          %261 = dma.hbm_to_vmem [thread:$0]  %s2, 2048, %s256, [#allocation6], 128, 128, 8
        $region20: #{tpu_custom_call.1} parent=11 // pred_fallthru
          _
        // Predicated region
        $region21: #{tpu_custom_call.1} parent=11 // pred_check
          %p262 = pneg %p111
        $region22: #{tpu_custom_call.1} parent=11 // pred_check_branch
          %264 = sbr.rel (%p262) target = $region24
        $region23: #{tpu_custom_call.1} parent=11 // pred_region
          %s266 = ssub.s32 2048, 2048
          %267 = vsyncadd [#allocation9], %s266
          %s268 = sshll.u32 [#allocation8], 4
          %s269 = int_to_ptr.vmem [resolvable:$true] %s268
          %274 = dma.hbm_to_vmem [thread:$0]  %s3, 2048, %s269, [#allocation9], 64, 64, 4
        $region24: #{tpu_custom_call.1} parent=11 // pred_fallthru
          _
        // Predicated region
        $region25: #{tpu_custom_call.1} parent=11 // pred_check
          %p275 = pneg %p132
        $region26: #{tpu_custom_call.1} parent=11 // pred_check_branch
          %277 = sbr.rel (%p275) target = $region28
        $region27: #{tpu_custom_call.1} parent=11 // pred_region
          _
        $region28: #{tpu_custom_call.1} parent=11 // pred_fallthru
          _
        // Predicated region
        $region29: #{tpu_custom_call.1} parent=11 // pred_check
          %p278 = pneg %p153
        $region30: #{tpu_custom_call.1} parent=11 // pred_check_branch
          %280 = sbr.rel (%p278) target = $region32
        $region31: #{tpu_custom_call.1} parent=11 // pred_region
          _
        $region32: #{tpu_custom_call.1} parent=11 // pred_fallthru
          _
        // Predicated region
        $region33: #{tpu_custom_call.1} parent=11 // pred_check
          %p281 = pneg %p174
        $region34: #{tpu_custom_call.1} parent=11 // pred_check_branch
          %283 = sbr.rel (%p281) target = $region36
        $region35: #{tpu_custom_call.1} parent=11 // pred_region
          %s285 = ssub.s32 1024, 1024
          %286 = vsyncadd [#allocation9], %s285
          %s287 = sshll.u32 [#allocation10], 4
          %s288 = int_to_ptr.vmem [resolvable:$true] %s287
          %293 = dma.hbm_to_vmem [thread:$0]  %s6, 1024, %s288, [#allocation9], 64, 64, 4
        $region36: #{tpu_custom_call.1} parent=11 // pred_fallthru
          _
        // Predicated region
        $region37: #{tpu_custom_call.1} parent=11 // pred_check
          %p294 = pneg %p195
        $region38: #{tpu_custom_call.1} parent=11 // pred_check_branch
          %296 = sbr.rel (%p294) target = $region40
        $region39: #{tpu_custom_call.1} parent=11 // pred_region
          _
        $region40: #{tpu_custom_call.1} parent=11 // pred_fallthru
          _
      $region12: #{tpu_custom_call.1} parent=5 // pred_fallthru
        _
      %p297 = scmp.lt.s32.totalorder %s22, 2
      // Predicated region
      $region41: #{tpu_custom_call.1} parent=5 // pred_check
        %p298 = pneg %p297
      $region42: #{tpu_custom_call.1} parent=5 // pred_check_branch
        %300 = sbr.rel (%p298) target = $region44
      $region43: #{tpu_custom_call.1} parent=5 // pred_region
        // Predicated region
        $region45: #{tpu_custom_call.1} parent=43 // pred_check
          %p301 = pneg %p42
        $region46: #{tpu_custom_call.1} parent=43 // pred_check_branch
          %303 = sbr.rel (%p301) target = $region48
        $region47: #{tpu_custom_call.1} parent=43 // pred_region
          %s304 = sand.u32 %s32, 1
          %s305 = scalar_lea.sflag [#allocation3], %s304
          %s306 = sand.u32 %s32, 1
          %s307 = smul.addr %s306, 128
          %s308 = scalar_lea.vmem [#allocation2], %s307
          %s309 = smul.u32 16, %s22
          %s311 = ssub.s32 2048, 2048
          %312 = vsyncadd %s305, %s311
          %s313 = smul.addr %s309, 128
          %s314 = scalar_lea.hbm %s0, %s313
          %s315 = sshll.u32 %s308, 4
          %s316 = int_to_ptr.vmem [resolvable:$true] %s315
          %321 = dma.hbm_to_vmem [thread:$0]  %s314, 2048, %s316, %s305, 128, 128, 8
        $region48: #{tpu_custom_call.1} parent=43 // pred_fallthru
          _
      $region44: #{tpu_custom_call.1} parent=5 // pred_fallthru
        _
      %p322 = scmp.le.s32.totalorder 1, %s22
      %p323 = scmp.lt.s32.totalorder %s22, 3
      %p324 = pnand %p322, %p323
      %p325 = pneg %p324
      // Predicated region
      $region49: #{tpu_custom_call.1} parent=5 // pred_check
        _
      $region50: #{tpu_custom_call.1} parent=5 // pred_check_branch
        %327 = sbr.rel (%p324) target = $region52
      $region51: #{tpu_custom_call.1} parent=5 // pred_region
        %s328 = ssub.s32 %s22, 1
        %s329 = sand.u32 %s35, 1
        %s330 = scalar_lea.sflag [#allocation3], %s329
        %s331 = sand.u32 %s35, 1
        %s332 = smul.addr %s331, 128
        %s333 = scalar_lea.vmem [#allocation2], %s332
        // Predicated region
        $region53: #{tpu_custom_call.1} parent=51 // pred_check
          %p334 = pneg %p48
        $region54: #{tpu_custom_call.1} parent=51 // pred_check_branch
          %336 = sbr.rel (%p334) target = $region56
        $region55: #{tpu_custom_call.1} parent=51 // pred_region
          %337 = dma.done %s330, 2048
        $region56: #{tpu_custom_call.1} parent=51 // pred_fallthru
          _
        // Predicated region
        $region57: #{tpu_custom_call.1} parent=51 // pred_check
          %p338 = pneg %p69
        $region58: #{tpu_custom_call.1} parent=51 // pred_check_branch
          %340 = sbr.rel (%p338) target = $region60
        $region59: #{tpu_custom_call.1} parent=51 // pred_region
          %341 = dma.done [#allocation6], 2048
        $region60: #{tpu_custom_call.1} parent=51 // pred_fallthru
          _
        // Predicated region
        $region61: #{tpu_custom_call.1} parent=51 // pred_check
          %p342 = pneg %p90
        $region62: #{tpu_custom_call.1} parent=51 // pred_check_branch
          %344 = sbr.rel (%p342) target = $region64
        $region63: #{tpu_custom_call.1} parent=51 // pred_region
          %345 = dma.done [#allocation6], 2048
        $region64: #{tpu_custom_call.1} parent=51 // pred_fallthru
          _
        // Predicated region
        $region65: #{tpu_custom_call.1} parent=51 // pred_check
          %p346 = pneg %p111
        $region66: #{tpu_custom_call.1} parent=51 // pred_check_branch
          %348 = sbr.rel (%p346) target = $region68
        $region67: #{tpu_custom_call.1} parent=51 // pred_region
          %349 = dma.done [#allocation9], 2048
        $region68: #{tpu_custom_call.1} parent=51 // pred_fallthru
          _
        // Predicated region
        $region69: #{tpu_custom_call.1} parent=51 // pred_check
          %p350 = pneg %p174
        $region70: #{tpu_custom_call.1} parent=51 // pred_check_branch
          %352 = sbr.rel (%p350) target = $region72
        $region71: #{tpu_custom_call.1} parent=51 // pred_region
          %353 = dma.done [#allocation9], 1024
        $region72: #{tpu_custom_call.1} parent=51 // pred_fallthru
          _
        %s354 = sand.u32 %s35, 1
        %s355 = scalar_lea.sflag [#allocation3], %s354
        %s356 = sand.u32 %s35, 1
        %s357 = smul.addr %s356, 128
        %s358 = scalar_lea.vmem [#allocation2], %s357
        %p359 = pneg %p48
        %p360 = pneg %p45
        %p361 = pneg %p69
        %p362 = pneg %p66
        %p363 = pneg %p90
        %p364 = pneg %p87
        %p365 = pneg %p111
        %p366 = pneg %p108
        %p367 = pneg %p132
        %p368 = pneg %p129
        %p369 = pneg %p153
        %p370 = pneg %p150
        %p371 = pneg %p174
        %p372 = pneg %p171
        %p373 = pneg %p195
        %p374 = pneg %p192
        %p375 = pneg %p221
        %p376 = pneg %p218
        %s377 = sand.u32 %s208, 1
        %s378 = scalar_lea.sflag [#allocation4], %s377
        %s379 = sand.u32 %s208, 1
        %s380 = smul.addr %s379, 128
        %s381 = scalar_lea.vmem [#allocation11], %s380
        %s382 = smul.u32 16, %s27
        %s383 = smul.u32 16, %s27
        %v385 = vld [vmem:[%s333] sm:$0xff]
        %v386 = vld [vmem:[%s333 + $0x8] sm:$0xff]
        %v387 = vld [vmem:[%s333 + $0x10] sm:$0xff]
        %v388 = vld [vmem:[%s333 + $0x18] sm:$0xff]
        %v389 = vld [vmem:[%s333 + $0x20] sm:$0xff]
        %v390 = vld [vmem:[%s333 + $0x28] sm:$0xff]
        %v391 = vld [vmem:[%s333 + $0x30] sm:$0xff]
        %v392 = vld [vmem:[%s333 + $0x38] sm:$0xff]
        %v393 = vld [vmem:[%s333 + $0x40] sm:$0xff]
        %v394 = vld [vmem:[%s333 + $0x48] sm:$0xff]
        %v395 = vld [vmem:[%s333 + $0x50] sm:$0xff]
        %v396 = vld [vmem:[%s333 + $0x58] sm:$0xff]
        %v397 = vld [vmem:[%s333 + $0x60] sm:$0xff]
        %v398 = vld [vmem:[%s333 + $0x68] sm:$0xff]
        %v399 = vld [vmem:[%s333 + $0x70] sm:$0xff]
        %v400 = vld [vmem:[%s333 + $0x78] sm:$0xff]
        %v401 = vpack.c.bf16 %v386, %v385
        %v402 = vpack.c.bf16 %v388, %v387
        %v403 = vpack.c.bf16 %v390, %v389
        %v404 = vpack.c.bf16 %v392, %v391
        %v405 = vpack.c.bf16 %v394, %v393
        %v406 = vpack.c.bf16 %v396, %v395
        %v407 = vpack.c.bf16 %v398, %v397
        %v408 = vpack.c.bf16 %v400, %v399
        %v409 = vld [vmem:[#allocation5] sm:$0xff]
        %v410 = vld [vmem:[#allocation5 + $0x8] sm:$0xff]
        %v411 = vld [vmem:[#allocation5 + $0x10] sm:$0xff]
        %v412 = vld [vmem:[#allocation5 + $0x18] sm:$0xff]
        %v413 = vld [vmem:[#allocation5 + $0x20] sm:$0xff]
        %v414 = vld [vmem:[#allocation5 + $0x28] sm:$0xff]
        %v415 = vld [vmem:[#allocation5 + $0x30] sm:$0xff]
        %v416 = vld [vmem:[#allocation5 + $0x38] sm:$0xff]
        %v417 = vld [vmem:[#allocation5 + $0x40] sm:$0xff]
        %v418 = vld [vmem:[#allocation5 + $0x48] sm:$0xff]
        %v419 = vld [vmem:[#allocation5 + $0x50] sm:$0xff]
        %v420 = vld [vmem:[#allocation5 + $0x58] sm:$0xff]
        %v421 = vld [vmem:[#allocation5 + $0x60] sm:$0xff]
        %v422 = vld [vmem:[#allocation5 + $0x68] sm:$0xff]
        %v423 = vld [vmem:[#allocation5 + $0x70] sm:$0xff]
        %v424 = vld [vmem:[#allocation5 + $0x78] sm:$0xff]
        %v441 = vunpack.c.l.b16 %v409
        %v442 = vunpack.c.h.b16 %v409
        %v443 = vunpack.c.l.b16 %v410
        %v444 = vunpack.c.h.b16 %v410
        %v445 = vunpack.c.l.b16 %v411
        %v446 = vunpack.c.h.b16 %v411
        %v447 = vunpack.c.l.b16 %v412
        %v448 = vunpack.c.h.b16 %v412
        %v449 = vunpack.c.l.b16 %v413
        %v450 = vunpack.c.h.b16 %v413
        %v451 = vunpack.c.l.b16 %v414
        %v452 = vunpack.c.h.b16 %v414
        %v453 = vunpack.c.l.b16 %v415
        %v454 = vunpack.c.h.b16 %v415
        %v455 = vunpack.c.l.b16 %v416
        %v456 = vunpack.c.h.b16 %v416
        %v457 = vunpack.c.l.b16 %v417
        %v458 = vunpack.c.h.b16 %v417
        %v459 = vunpack.c.l.b16 %v418
        %v460 = vunpack.c.h.b16 %v418
        %v461 = vunpack.c.l.b16 %v419
        %v462 = vunpack.c.h.b16 %v419
        %v463 = vunpack.c.l.b16 %v420
        %v464 = vunpack.c.h.b16 %v420
        %v465 = vunpack.c.l.b16 %v421
        %v466 = vunpack.c.h.b16 %v421
        %v467 = vunpack.c.l.b16 %v422
        %v468 = vunpack.c.h.b16 %v422
        %v469 = vunpack.c.l.b16 %v423
        %v470 = vunpack.c.h.b16 %v423
        %v471 = vunpack.c.l.b16 %v424
        %v472 = vunpack.c.h.b16 %v424
        %v473 = vpack.c.b16 %v443, %v441
        %v474 = vpack.c.b16 %v444, %v442
        %v475 = vpack.c.b16 %v447, %v445
        %v476 = vpack.c.b16 %v448, %v446
        %v477 = vpack.c.b16 %v451, %v449
        %v478 = vpack.c.b16 %v452, %v450
        %v479 = vpack.c.b16 %v455, %v453
        %v480 = vpack.c.b16 %v456, %v454
        %v481 = vpack.c.b16 %v459, %v457
        %v482 = vpack.c.b16 %v460, %v458
        %v483 = vpack.c.b16 %v463, %v461
        %v484 = vpack.c.b16 %v464, %v462
        %v485 = vpack.c.b16 %v467, %v465
        %v486 = vpack.c.b16 %v468, %v466
        %v487 = vpack.c.b16 %v471, %v469
        %v488 = vpack.c.b16 %v472, %v470
        %505 = vmatprep.subr.bf16.mxu0 %v488
        %506 = vmatpush1.bf16.msra.mxu0 %v487
        %507 = vmatprep.subr.bf16.mxu0 %v486
        %508 = vmatpush1.bf16.msra.mxu0 %v485
        %509 = vmatprep.subr.bf16.mxu0 %v484
        %510 = vmatpush1.bf16.msra.mxu0 %v483
        %511 = vmatprep.subr.bf16.mxu0 %v482
        %512 = vmatpush1.bf16.msra.mxu0 %v481
        %513 = vmatprep.subr.bf16.mxu0 %v480
        %514 = vmatpush1.bf16.msra.mxu0 %v479
        %515 = vmatprep.subr.bf16.mxu0 %v478
        %516 = vmatpush1.bf16.msra.mxu0 %v477
        %517 = vmatprep.subr.bf16.mxu0 %v476
        %518 = vmatpush1.bf16.msra.mxu0 %v475
        %519 = vmatprep.subr.bf16.mxu0 %v474
        %520 = vmatpush1.bf16.msra.mxu0 %v473
        %521 = vmatprep.subr.bf16.mxu0 0
        %522 = vmatpush2.bf16.msra.mxu0 0
        %523 = vmatprep.subr.bf16.mxu0 0
        %524 = vmatpush2.bf16.msra.mxu0 0
        %525 = vmatprep.subr.bf16.mxu0 0
        %526 = vmatpush2.bf16.msra.mxu0 0
        %527 = vmatprep.subr.bf16.mxu0 0
        %528 = vmatpush2.bf16.msra.mxu0 0
        %529 = vmatprep.subr.bf16.mxu0 0
        %530 = vmatpush2.bf16.msra.mxu0 0
        %531 = vmatprep.subr.bf16.mxu0 0
        %532 = vmatpush2.bf16.msra.mxu0 0
        %533 = vmatprep.subr.bf16.mxu0 0
        %534 = vmatpush2.bf16.msra.mxu0 0
        %535 = vmatprep.subr.bf16.mxu0 0
        %536 = vmatpush2.bf16.msra.mxu0 0
        %537 = vmatprep.mubr.bf16.mxu0 0
        %538 = vmatmul.mubr.bf16.gmra.mxu0 %v401
        %v539 = vpop.f32.mrf.mxu0
        %v540 = vadd.f32 0.0, %v539
        %v541 = vpop.f32.mrf.mxu0
        %v542 = vadd.f32 0.0, %v541
        %v543 = vpop.f32.mrf.mxu0
        %v544 = vadd.f32 0.0, %v543
        %v545 = vpop.f32.mrf.mxu0
        %v546 = vadd.f32 0.0, %v545
        %547 = vmatprep.mubr.bf16.mxu0 0
        %548 = vmatmul.mubr.bf16.gmra.mxu0 %v402
        %v549 = vpop.f32.mrf.mxu0
        %v550 = vadd.f32 0.0, %v549
        %v551 = vpop.f32.mrf.mxu0
        %v552 = vadd.f32 0.0, %v551
        %v553 = vpop.f32.mrf.mxu0
        %v554 = vadd.f32 0.0, %v553
        %v555 = vpop.f32.mrf.mxu0
        %v556 = vadd.f32 0.0, %v555
        %557 = vmatprep.mubr.bf16.mxu0 0
        %558 = vmatmul.mubr.bf16.gmra.mxu0 %v403
        %v559 = vpop.f32.mrf.mxu0
        %v560 = vadd.f32 0.0, %v559
        %v561 = vpop.f32.mrf.mxu0
        %v562 = vadd.f32 0.0, %v561
        %v563 = vpop.f32.mrf.mxu0
        %v564 = vadd.f32 0.0, %v563
        %v565 = vpop.f32.mrf.mxu0
        %v566 = vadd.f32 0.0, %v565
        %567 = vmatprep.mubr.bf16.mxu0 0
        %568 = vmatmul.mubr.bf16.gmra.mxu0 %v404
        %v569 = vpop.f32.mrf.mxu0
        %v570 = vadd.f32 0.0, %v569
        %v571 = vpop.f32.mrf.mxu0
        %v572 = vadd.f32 0.0, %v571
        %v573 = vpop.f32.mrf.mxu0
        %v574 = vadd.f32 0.0, %v573
        %v575 = vpop.f32.mrf.mxu0
        %v576 = vadd.f32 0.0, %v575
        %577 = vmatprep.mubr.bf16.mxu0 0
        %578 = vmatmul.mubr.bf16.gmra.mxu0 %v405
        %v579 = vpop.f32.mrf.mxu0
        %v580 = vadd.f32 0.0, %v579
        %v581 = vpop.f32.mrf.mxu0
        %v582 = vadd.f32 0.0, %v581
        %v583 = vpop.f32.mrf.mxu0
        %v584 = vadd.f32 0.0, %v583
        %v585 = vpop.f32.mrf.mxu0
        %v586 = vadd.f32 0.0, %v585
        %587 = vmatprep.mubr.bf16.mxu0 0
        %588 = vmatmul.mubr.bf16.gmra.mxu0 %v406
        %v589 = vpop.f32.mrf.mxu0
        %v590 = vadd.f32 0.0, %v589
        %v591 = vpop.f32.mrf.mxu0
        %v592 = vadd.f32 0.0, %v591
        %v593 = vpop.f32.mrf.mxu0
        %v594 = vadd.f32 0.0, %v593
        %v595 = vpop.f32.mrf.mxu0
        %v596 = vadd.f32 0.0, %v595
        %597 = vmatprep.mubr.bf16.mxu0 0
        %598 = vmatmul.mubr.bf16.gmra.mxu0 %v407
        %v599 = vpop.f32.mrf.mxu0
        %v600 = vadd.f32 0.0, %v599
        %v601 = vpop.f32.mrf.mxu0
        %v602 = vadd.f32 0.0, %v601
        %v603 = vpop.f32.mrf.mxu0
        %v604 = vadd.f32 0.0, %v603
        %v605 = vpop.f32.mrf.mxu0
        %v606 = vadd.f32 0.0, %v605
        %607 = vmatprep.mubr.bf16.mxu0 0
        %608 = vmatmul.mubr.bf16.gmra.mxu0 %v408
        %v609 = vpop.f32.mrf.mxu0
        %v610 = vadd.f32 0.0, %v609
        %v611 = vpop.f32.mrf.mxu0
        %v612 = vadd.f32 0.0, %v611
        %v613 = vpop.f32.mrf.mxu0
        %v614 = vadd.f32 0.0, %v613
        %v615 = vpop.f32.mrf.mxu0
        %v616 = vadd.f32 0.0, %v615
        %617 = vdwg.mxu0
        %v618 = vld [vmem:[#allocation7] sm:$0xff]
        %v619 = vld [vmem:[#allocation7 + $0x8] sm:$0xff]
        %v620 = vld [vmem:[#allocation7 + $0x10] sm:$0xff]
        %v621 = vld [vmem:[#allocation7 + $0x18] sm:$0xff]
        %v622 = vld [vmem:[#allocation7 + $0x20] sm:$0xff]
        %v623 = vld [vmem:[#allocation7 + $0x28] sm:$0xff]
        %v624 = vld [vmem:[#allocation7 + $0x30] sm:$0xff]
        %v625 = vld [vmem:[#allocation7 + $0x38] sm:$0xff]
        %v626 = vld [vmem:[#allocation7 + $0x40] sm:$0xff]
        %v627 = vld [vmem:[#allocation7 + $0x48] sm:$0xff]
        %v628 = vld [vmem:[#allocation7 + $0x50] sm:$0xff]
        %v629 = vld [vmem:[#allocation7 + $0x58] sm:$0xff]
        %v630 = vld [vmem:[#allocation7 + $0x60] sm:$0xff]
        %v631 = vld [vmem:[#allocation7 + $0x68] sm:$0xff]
        %v632 = vld [vmem:[#allocation7 + $0x70] sm:$0xff]
        %v633 = vld [vmem:[#allocation7 + $0x78] sm:$0xff]
        %v650 = vunpack.c.l.b16 %v618
        %v651 = vunpack.c.h.b16 %v618
        %v652 = vunpack.c.l.b16 %v619
        %v653 = vunpack.c.h.b16 %v619
        %v654 = vunpack.c.l.b16 %v620
        %v655 = vunpack.c.h.b16 %v620
        %v656 = vunpack.c.l.b16 %v621
        %v657 = vunpack.c.h.b16 %v621
        %v658 = vunpack.c.l.b16 %v622
        %v659 = vunpack.c.h.b16 %v622
        %v660 = vunpack.c.l.b16 %v623
        %v661 = vunpack.c.h.b16 %v623
        %v662 = vunpack.c.l.b16 %v624
        %v663 = vunpack.c.h.b16 %v624
        %v664 = vunpack.c.l.b16 %v625
        %v665 = vunpack.c.h.b16 %v625
        %v666 = vunpack.c.l.b16 %v626
        %v667 = vunpack.c.h.b16 %v626
        %v668 = vunpack.c.l.b16 %v627
        %v669 = vunpack.c.h.b16 %v627
        %v670 = vunpack.c.l.b16 %v628
        %v671 = vunpack.c.h.b16 %v628
        %v672 = vunpack.c.l.b16 %v629
        %v673 = vunpack.c.h.b16 %v629
        %v674 = vunpack.c.l.b16 %v630
        %v675 = vunpack.c.h.b16 %v630
        %v676 = vunpack.c.l.b16 %v631
        %v677 = vunpack.c.h.b16 %v631
        %v678 = vunpack.c.l.b16 %v632
        %v679 = vunpack.c.h.b16 %v632
        %v680 = vunpack.c.l.b16 %v633
        %v681 = vunpack.c.h.b16 %v633
        %v682 = vpack.c.b16 %v652, %v650
        %v683 = vpack.c.b16 %v653, %v651
        %v684 = vpack.c.b16 %v656, %v654
        %v685 = vpack.c.b16 %v657, %v655
        %v686 = vpack.c.b16 %v660, %v658
        %v687 = vpack.c.b16 %v661, %v659
        %v688 = vpack.c.b16 %v664, %v662
        %v689 = vpack.c.b16 %v665, %v663
        %v690 = vpack.c.b16 %v668, %v666
        %v691 = vpack.c.b16 %v669, %v667
        %v692 = vpack.c.b16 %v672, %v670
        %v693 = vpack.c.b16 %v673, %v671
        %v694 = vpack.c.b16 %v676, %v674
        %v695 = vpack.c.b16 %v677, %v675
        %v696 = vpack.c.b16 %v680, %v678
        %v697 = vpack.c.b16 %v681, %v679
        %714 = vmatprep.subr.bf16.mxu0 %v697
        %715 = vmatpush1.bf16.msra.mxu0 %v696
        %716 = vmatprep.subr.bf16.mxu0 %v695
        %717 = vmatpush1.bf16.msra.mxu0 %v694
        %718 = vmatprep.subr.bf16.mxu0 %v693
        %719 = vmatpush1.bf16.msra.mxu0 %v692
        %720 = vmatprep.subr.bf16.mxu0 %v691
        %721 = vmatpush1.bf16.msra.mxu0 %v690
        %722 = vmatprep.subr.bf16.mxu0 %v689
        %723 = vmatpush1.bf16.msra.mxu0 %v688
        %724 = vmatprep.subr.bf16.mxu0 %v687
        %725 = vmatpush1.bf16.msra.mxu0 %v686
        %726 = vmatprep.subr.bf16.mxu0 %v685
        %727 = vmatpush1.bf16.msra.mxu0 %v684
        %728 = vmatprep.subr.bf16.mxu0 %v683
        %729 = vmatpush1.bf16.msra.mxu0 %v682
        %730 = vmatprep.subr.bf16.mxu0 0
        %731 = vmatpush2.bf16.msra.mxu0 0
        %732 = vmatprep.subr.bf16.mxu0 0
        %733 = vmatpush2.bf16.msra.mxu0 0
        %734 = vmatprep.subr.bf16.mxu0 0
        %735 = vmatpush2.bf16.msra.mxu0 0
        %736 = vmatprep.subr.bf16.mxu0 0
        %737 = vmatpush2.bf16.msra.mxu0 0
        %738 = vmatprep.subr.bf16.mxu0 0
        %739 = vmatpush2.bf16.msra.mxu0 0
        %740 = vmatprep.subr.bf16.mxu0 0
        %741 = vmatpush2.bf16.msra.mxu0 0
        %742 = vmatprep.subr.bf16.mxu0 0
        %743 = vmatpush2.bf16.msra.mxu0 0
        %744 = vmatprep.subr.bf16.mxu0 0
        %745 = vmatpush2.bf16.msra.mxu0 0
        %746 = vmatprep.mubr.bf16.mxu0 0
        %747 = vmatmul.mubr.bf16.gmra.mxu0 %v401
        %v748 = vpop.f32.mrf.mxu0
        %v749 = vadd.f32 0.0, %v748
        %v750 = vpop.f32.mrf.mxu0
        %v751 = vadd.f32 0.0, %v750
        %v752 = vpop.f32.mrf.mxu0
        %v753 = vadd.f32 0.0, %v752
        %v754 = vpop.f32.mrf.mxu0
        %v755 = vadd.f32 0.0, %v754
        %756 = vmatprep.mubr.bf16.mxu0 0
        %757 = vmatmul.mubr.bf16.gmra.mxu0 %v402
        %v758 = vpop.f32.mrf.mxu0
        %v759 = vadd.f32 0.0, %v758
        %v760 = vpop.f32.mrf.mxu0
        %v761 = vadd.f32 0.0, %v760
        %v762 = vpop.f32.mrf.mxu0
        %v763 = vadd.f32 0.0, %v762
        %v764 = vpop.f32.mrf.mxu0
        %v765 = vadd.f32 0.0, %v764
        %766 = vmatprep.mubr.bf16.mxu0 0
        %767 = vmatmul.mubr.bf16.gmra.mxu0 %v403
        %v768 = vpop.f32.mrf.mxu0
        %v769 = vadd.f32 0.0, %v768
        %v770 = vpop.f32.mrf.mxu0
        %v771 = vadd.f32 0.0, %v770
        %v772 = vpop.f32.mrf.mxu0
        %v773 = vadd.f32 0.0, %v772
        %v774 = vpop.f32.mrf.mxu0
        %v775 = vadd.f32 0.0, %v774
        %776 = vmatprep.mubr.bf16.mxu0 0
        %777 = vmatmul.mubr.bf16.gmra.mxu0 %v404
        %v778 = vpop.f32.mrf.mxu0
        %v779 = vadd.f32 0.0, %v778
        %v780 = vpop.f32.mrf.mxu0
        %v781 = vadd.f32 0.0, %v780
        %v782 = vpop.f32.mrf.mxu0
        %v783 = vadd.f32 0.0, %v782
        %v784 = vpop.f32.mrf.mxu0
        %v785 = vadd.f32 0.0, %v784
        %786 = vmatprep.mubr.bf16.mxu0 0
        %787 = vmatmul.mubr.bf16.gmra.mxu0 %v405
        %v788 = vpop.f32.mrf.mxu0
        %v789 = vadd.f32 0.0, %v788
        %v790 = vpop.f32.mrf.mxu0
        %v791 = vadd.f32 0.0, %v790
        %v792 = vpop.f32.mrf.mxu0
        %v793 = vadd.f32 0.0, %v792
        %v794 = vpop.f32.mrf.mxu0
        %v795 = vadd.f32 0.0, %v794
        %796 = vmatprep.mubr.bf16.mxu0 0
        %797 = vmatmul.mubr.bf16.gmra.mxu0 %v406
        %v798 = vpop.f32.mrf.mxu0
        %v799 = vadd.f32 0.0, %v798
        %v800 = vpop.f32.mrf.mxu0
        %v801 = vadd.f32 0.0, %v800
        %v802 = vpop.f32.mrf.mxu0
        %v803 = vadd.f32 0.0, %v802
        %v804 = vpop.f32.mrf.mxu0
        %v805 = vadd.f32 0.0, %v804
        %806 = vmatprep.mubr.bf16.mxu0 0
        %807 = vmatmul.mubr.bf16.gmra.mxu0 %v407
        %v808 = vpop.f32.mrf.mxu0
        %v809 = vadd.f32 0.0, %v808
        %v810 = vpop.f32.mrf.mxu0
        %v811 = vadd.f32 0.0, %v810
        %v812 = vpop.f32.mrf.mxu0
        %v813 = vadd.f32 0.0, %v812
        %v814 = vpop.f32.mrf.mxu0
        %v815 = vadd.f32 0.0, %v814
        %816 = vmatprep.mubr.bf16.mxu0 0
        %817 = vmatmul.mubr.bf16.gmra.mxu0 %v408
        %v818 = vpop.f32.mrf.mxu0
        %v819 = vadd.f32 0.0, %v818
        %v820 = vpop.f32.mrf.mxu0
        %v821 = vadd.f32 0.0, %v820
        %v822 = vpop.f32.mrf.mxu0
        %v823 = vadd.f32 0.0, %v822
        %v824 = vpop.f32.mrf.mxu0
        %v825 = vadd.f32 0.0, %v824
        %826 = vdwg.mxu0
        %v827 = vxor.u32 %v540, 2147483648
        %v828 = vxor.u32 %v542, 2147483648
        %v829 = vxor.u32 %v544, 2147483648
        %v830 = vxor.u32 %v546, 2147483648
        %v831 = vxor.u32 %v550, 2147483648
        %v832 = vxor.u32 %v552, 2147483648
        %v833 = vxor.u32 %v554, 2147483648
        %v834 = vxor.u32 %v556, 2147483648
        %v835 = vxor.u32 %v560, 2147483648
        %v836 = vxor.u32 %v562, 2147483648
        %v837 = vxor.u32 %v564, 2147483648
        %v838 = vxor.u32 %v566, 2147483648
        %v839 = vxor.u32 %v570, 2147483648
        %v840 = vxor.u32 %v572, 2147483648
        %v841 = vxor.u32 %v574, 2147483648
        %v842 = vxor.u32 %v576, 2147483648
        %v843 = vxor.u32 %v580, 2147483648
        %v844 = vxor.u32 %v582, 2147483648
        %v845 = vxor.u32 %v584, 2147483648
        %v846 = vxor.u32 %v586, 2147483648
        %v847 = vxor.u32 %v590, 2147483648
        %v848 = vxor.u32 %v592, 2147483648
        %v849 = vxor.u32 %v594, 2147483648
        %v850 = vxor.u32 %v596, 2147483648
        %v851 = vxor.u32 %v600, 2147483648
        %v852 = vxor.u32 %v602, 2147483648
        %v853 = vxor.u32 %v604, 2147483648
        %v854 = vxor.u32 %v606, 2147483648
        %v855 = vxor.u32 %v610, 2147483648
        %v856 = vxor.u32 %v612, 2147483648
        %v857 = vxor.u32 %v614, 2147483648
        %v858 = vxor.u32 %v616, 2147483648
        %v859 = vmul.f32 %v827, 1.442695
        %v860 = vpow.pop %v859
        %v861 = vmul.f32 %v828, 1.442695
        %v862 = vpow.pop %v861
        %v863 = vmul.f32 %v829, 1.442695
        %v864 = vpow.pop %v863
        %v865 = vmul.f32 %v830, 1.442695
        %v866 = vpow.pop %v865
        %v867 = vmul.f32 %v831, 1.442695
        %v868 = vpow.pop %v867
        %v869 = vmul.f32 %v832, 1.442695
        %v870 = vpow.pop %v869
        %v871 = vmul.f32 %v833, 1.442695
        %v872 = vpow.pop %v871
        %v873 = vmul.f32 %v834, 1.442695
        %v874 = vpow.pop %v873
        %v875 = vmul.f32 %v835, 1.442695
        %v876 = vpow.pop %v875
        %v877 = vmul.f32 %v836, 1.442695
        %v878 = vpow.pop %v877
        %v879 = vmul.f32 %v837, 1.442695
        %v880 = vpow.pop %v879
        %v881 = vmul.f32 %v838, 1.442695
        %v882 = vpow.pop %v881
        %v883 = vmul.f32 %v839, 1.442695
        %v884 = vpow.pop %v883
        %v885 = vmul.f32 %v840, 1.442695
        %v886 = vpow.pop %v885
        %v887 = vmul.f32 %v841, 1.442695
        %v888 = vpow.pop %v887
        %v889 = vmul.f32 %v842, 1.442695
        %v890 = vpow.pop %v889
        %v891 = vmul.f32 %v843, 1.442695
        %v892 = vpow.pop %v891
        %v893 = vmul.f32 %v844, 1.442695
        %v894 = vpow.pop %v893
        %v895 = vmul.f32 %v845, 1.442695
        %v896 = vpow.pop %v895
        %v897 = vmul.f32 %v846, 1.442695
        %v898 = vpow.pop %v897
        %v899 = vmul.f32 %v847, 1.442695
        %v900 = vpow.pop %v899
        %v901 = vmul.f32 %v848, 1.442695
        %v902 = vpow.pop %v901
        %v903 = vmul.f32 %v849, 1.442695
        %v904 = vpow.pop %v903
        %v905 = vmul.f32 %v850, 1.442695
        %v906 = vpow.pop %v905
        %v907 = vmul.f32 %v851, 1.442695
        %v908 = vpow.pop %v907
        %v909 = vmul.f32 %v852, 1.442695
        %v910 = vpow.pop %v909
        %v911 = vmul.f32 %v853, 1.442695
        %v912 = vpow.pop %v911
        %v913 = vmul.f32 %v854, 1.442695
        %v914 = vpow.pop %v913
        %v915 = vmul.f32 %v855, 1.442695
        %v916 = vpow.pop %v915
        %v917 = vmul.f32 %v856, 1.442695
        %v918 = vpow.pop %v917
        %v919 = vmul.f32 %v857, 1.442695
        %v920 = vpow.pop %v919
        %v921 = vmul.f32 %v858, 1.442695
        %v922 = vpow.pop %v921
        %v923 = vadd.f32 %v860, 1.0
        %v924 = vadd.f32 %v862, 1.0
        %v925 = vadd.f32 %v864, 1.0
        %v926 = vadd.f32 %v866, 1.0
        %v927 = vadd.f32 %v868, 1.0
        %v928 = vadd.f32 %v870, 1.0
        %v929 = vadd.f32 %v872, 1.0
        %v930 = vadd.f32 %v874, 1.0
        %v931 = vadd.f32 %v876, 1.0
        %v932 = vadd.f32 %v878, 1.0
        %v933 = vadd.f32 %v880, 1.0
        %v934 = vadd.f32 %v882, 1.0
        %v935 = vadd.f32 %v884, 1.0
        %v936 = vadd.f32 %v886, 1.0
        %v937 = vadd.f32 %v888, 1.0
        %v938 = vadd.f32 %v890, 1.0
        %v939 = vadd.f32 %v892, 1.0
        %v940 = vadd.f32 %v894, 1.0
        %v941 = vadd.f32 %v896, 1.0
        %v942 = vadd.f32 %v898, 1.0
        %v943 = vadd.f32 %v900, 1.0
        %v944 = vadd.f32 %v902, 1.0
        %v945 = vadd.f32 %v904, 1.0
        %v946 = vadd.f32 %v906, 1.0
        %v947 = vadd.f32 %v908, 1.0
        %v948 = vadd.f32 %v910, 1.0
        %v949 = vadd.f32 %v912, 1.0
        %v950 = vadd.f32 %v914, 1.0
        %v951 = vadd.f32 %v916, 1.0
        %v952 = vadd.f32 %v918, 1.0
        %v953 = vadd.f32 %v920, 1.0
        %v954 = vadd.f32 %v922, 1.0
        %v955 = vrcp.pop %v923
        %v956 = vmul.f32 1.0, %v955
        %v957 = vrcp.pop %v924
        %v958 = vmul.f32 1.0, %v957
        %v959 = vrcp.pop %v925
        %v960 = vmul.f32 1.0, %v959
        %v961 = vrcp.pop %v926
        %v962 = vmul.f32 1.0, %v961
        %v963 = vrcp.pop %v927
        %v964 = vmul.f32 1.0, %v963
        %v965 = vrcp.pop %v928
        %v966 = vmul.f32 1.0, %v965
        %v967 = vrcp.pop %v929
        %v968 = vmul.f32 1.0, %v967
        %v969 = vrcp.pop %v930
        %v970 = vmul.f32 1.0, %v969
        %v971 = vrcp.pop %v931
        %v972 = vmul.f32 1.0, %v971
        %v973 = vrcp.pop %v932
        %v974 = vmul.f32 1.0, %v973
        %v975 = vrcp.pop %v933
        %v976 = vmul.f32 1.0, %v975
        %v977 = vrcp.pop %v934
        %v978 = vmul.f32 1.0, %v977
        %v979 = vrcp.pop %v935
        %v980 = vmul.f32 1.0, %v979
        %v981 = vrcp.pop %v936
        %v982 = vmul.f32 1.0, %v981
        %v983 = vrcp.pop %v937
        %v984 = vmul.f32 1.0, %v983
        %v985 = vrcp.pop %v938
        %v986 = vmul.f32 1.0, %v985
        %v987 = vrcp.pop %v939
        %v988 = vmul.f32 1.0, %v987
        %v989 = vrcp.pop %v940
        %v990 = vmul.f32 1.0, %v989
        %v991 = vrcp.pop %v941
        %v992 = vmul.f32 1.0, %v991
        %v993 = vrcp.pop %v942
        %v994 = vmul.f32 1.0, %v993
        %v995 = vrcp.pop %v943
        %v996 = vmul.f32 1.0, %v995
        %v997 = vrcp.pop %v944
        %v998 = vmul.f32 1.0, %v997
        %v999 = vrcp.pop %v945
        %v1000 = vmul.f32 1.0, %v999
        %v1001 = vrcp.pop %v946
        %v1002 = vmul.f32 1.0, %v1001
        %v1003 = vrcp.pop %v947
        %v1004 = vmul.f32 1.0, %v1003
        %v1005 = vrcp.pop %v948
        %v1006 = vmul.f32 1.0, %v1005
        %v1007 = vrcp.pop %v949
        %v1008 = vmul.f32 1.0, %v1007
        %v1009 = vrcp.pop %v950
        %v1010 = vmul.f32 1.0, %v1009
        %v1011 = vrcp.pop %v951
        %v1012 = vmul.f32 1.0, %v1011
        %v1013 = vrcp.pop %v952
        %v1014 = vmul.f32 1.0, %v1013
        %v1015 = vrcp.pop %v953
        %v1016 = vmul.f32 1.0, %v1015
        %v1017 = vrcp.pop %v954
        %v1018 = vmul.f32 1.0, %v1017
        %v1019 = vmul.f32 %v540, %v956
        %v1020 = vmul.f32 %v542, %v958
        %v1021 = vmul.f32 %v544, %v960
        %v1022 = vmul.f32 %v546, %v962
        %v1023 = vmul.f32 %v550, %v964
        %v1024 = vmul.f32 %v552, %v966
        %v1025 = vmul.f32 %v554, %v968
        %v1026 = vmul.f32 %v556, %v970
        %v1027 = vmul.f32 %v560, %v972
        %v1028 = vmul.f32 %v562, %v974
        %v1029 = vmul.f32 %v564, %v976
        %v1030 = vmul.f32 %v566, %v978
        %v1031 = vmul.f32 %v570, %v980
        %v1032 = vmul.f32 %v572, %v982
        %v1033 = vmul.f32 %v574, %v984
        %v1034 = vmul.f32 %v576, %v986
        %v1035 = vmul.f32 %v580, %v988
        %v1036 = vmul.f32 %v582, %v990
        %v1037 = vmul.f32 %v584, %v992
        %v1038 = vmul.f32 %v586, %v994
        %v1039 = vmul.f32 %v590, %v996
        %v1040 = vmul.f32 %v592, %v998
        %v1041 = vmul.f32 %v594, %v1000
        %v1042 = vmul.f32 %v596, %v1002
        %v1043 = vmul.f32 %v600, %v1004
        %v1044 = vmul.f32 %v602, %v1006
        %v1045 = vmul.f32 %v604, %v1008
        %v1046 = vmul.f32 %v606, %v1010
        %v1047 = vmul.f32 %v610, %v1012
        %v1048 = vmul.f32 %v612, %v1014
        %v1049 = vmul.f32 %v614, %v1016
        %v1050 = vmul.f32 %v616, %v1018
        %v1051 = vmul.f32 %v1019, %v749
        %v1052 = vmul.f32 %v1020, %v751
        %v1053 = vmul.f32 %v1021, %v753
        %v1054 = vmul.f32 %v1022, %v755
        %v1055 = vmul.f32 %v1023, %v759
        %v1056 = vmul.f32 %v1024, %v761
        %v1057 = vmul.f32 %v1025, %v763
        %v1058 = vmul.f32 %v1026, %v765
        %v1059 = vmul.f32 %v1027, %v769
        %v1060 = vmul.f32 %v1028, %v771
        %v1061 = vmul.f32 %v1029, %v773
        %v1062 = vmul.f32 %v1030, %v775
        %v1063 = vmul.f32 %v1031, %v779
        %v1064 = vmul.f32 %v1032, %v781
        %v1065 = vmul.f32 %v1033, %v783
        %v1066 = vmul.f32 %v1034, %v785
        %v1067 = vmul.f32 %v1035, %v789
        %v1068 = vmul.f32 %v1036, %v791
        %v1069 = vmul.f32 %v1037, %v793
        %v1070 = vmul.f32 %v1038, %v795
        %v1071 = vmul.f32 %v1039, %v799
        %v1072 = vmul.f32 %v1040, %v801
        %v1073 = vmul.f32 %v1041, %v803
        %v1074 = vmul.f32 %v1042, %v805
        %v1075 = vmul.f32 %v1043, %v809
        %v1076 = vmul.f32 %v1044, %v811
        %v1077 = vmul.f32 %v1045, %v813
        %v1078 = vmul.f32 %v1046, %v815
        %v1079 = vmul.f32 %v1047, %v819
        %v1080 = vmul.f32 %v1048, %v821
        %v1081 = vmul.f32 %v1049, %v823
        %v1082 = vmul.f32 %v1050, %v825
        %v1083 = vpack.c.bf16 %v1053, %v1051
        %v1084 = vpack.c.bf16 %v1054, %v1052
        %v1085 = vpack.c.bf16 %v1057, %v1055
        %v1086 = vpack.c.bf16 %v1058, %v1056
        %v1087 = vpack.c.bf16 %v1061, %v1059
        %v1088 = vpack.c.bf16 %v1062, %v1060
        %v1089 = vpack.c.bf16 %v1065, %v1063
        %v1090 = vpack.c.bf16 %v1066, %v1064
        %v1091 = vpack.c.bf16 %v1069, %v1067
        %v1092 = vpack.c.bf16 %v1070, %v1068
        %v1093 = vpack.c.bf16 %v1073, %v1071
        %v1094 = vpack.c.bf16 %v1074, %v1072
        %v1095 = vpack.c.bf16 %v1077, %v1075
        %v1096 = vpack.c.bf16 %v1078, %v1076
        %v1097 = vpack.c.bf16 %v1081, %v1079
        %v1098 = vpack.c.bf16 %v1082, %v1080
        %v1099 = vld [vmem:[#allocation8] sm:$0xf]
        %v1100 = vld [vmem:[#allocation8 + $0x4] sm:$0xf]
        %v1101 = vld [vmem:[#allocation8 + $0x8] sm:$0xf]
        %v1102 = vld [vmem:[#allocation8 + $0xc] sm:$0xf]
        %v1103 = vld [vmem:[#allocation8 + $0x10] sm:$0xf]
        %v1104 = vld [vmem:[#allocation8 + $0x14] sm:$0xf]
        %v1105 = vld [vmem:[#allocation8 + $0x18] sm:$0xf]
        %v1106 = vld [vmem:[#allocation8 + $0x1c] sm:$0xf]
        %v1107 = vld [vmem:[#allocation8 + $0x20] sm:$0xf]
        %v1108 = vld [vmem:[#allocation8 + $0x24] sm:$0xf]
        %v1109 = vld [vmem:[#allocation8 + $0x28] sm:$0xf]
        %v1110 = vld [vmem:[#allocation8 + $0x2c] sm:$0xf]
        %v1111 = vld [vmem:[#allocation8 + $0x30] sm:$0xf]
        %v1112 = vld [vmem:[#allocation8 + $0x34] sm:$0xf]
        %v1113 = vld [vmem:[#allocation8 + $0x38] sm:$0xf]
        %v1114 = vld [vmem:[#allocation8 + $0x3c] sm:$0xf]
        %v1115 = vld [vmem:[#allocation8 + $0x40] sm:$0xf]
        %v1116 = vld [vmem:[#allocation8 + $0x44] sm:$0xf]
        %v1117 = vld [vmem:[#allocation8 + $0x48] sm:$0xf]
        %v1118 = vld [vmem:[#allocation8 + $0x4c] sm:$0xf]
        %v1119 = vld [vmem:[#allocation8 + $0x50] sm:$0xf]
        %v1120 = vld [vmem:[#allocation8 + $0x54] sm:$0xf]
        %v1121 = vld [vmem:[#allocation8 + $0x58] sm:$0xf]
        %v1122 = vld [vmem:[#allocation8 + $0x5c] sm:$0xf]
        %v1123 = vld [vmem:[#allocation8 + $0x60] sm:$0xf]
        %v1124 = vld [vmem:[#allocation8 + $0x64] sm:$0xf]
        %v1125 = vld [vmem:[#allocation8 + $0x68] sm:$0xf]
        %v1126 = vld [vmem:[#allocation8 + $0x6c] sm:$0xf]
        %v1127 = vld [vmem:[#allocation8 + $0x70] sm:$0xf]
        %v1128 = vld [vmem:[#allocation8 + $0x74] sm:$0xf]
        %v1129 = vld [vmem:[#allocation8 + $0x78] sm:$0xf]
        %v1130 = vld [vmem:[#allocation8 + $0x7c] sm:$0xf]
        %v1163 = vunpack.c.l.b16 %v1099
        %v1164 = vunpack.c.l.b16 %v1100
        %v1165 = vunpack.c.l.b16 %v1101
        %v1166 = vunpack.c.l.b16 %v1102
        %v1167 = vunpack.c.l.b16 %v1103
        %v1168 = vunpack.c.l.b16 %v1104
        %v1169 = vunpack.c.l.b16 %v1105
        %v1170 = vunpack.c.l.b16 %v1106
        %v1171 = vunpack.c.l.b16 %v1107
        %v1172 = vunpack.c.l.b16 %v1108
        %v1173 = vunpack.c.l.b16 %v1109
        %v1174 = vunpack.c.l.b16 %v1110
        %v1175 = vunpack.c.l.b16 %v1111
        %v1176 = vunpack.c.l.b16 %v1112
        %v1177 = vunpack.c.l.b16 %v1113
        %v1178 = vunpack.c.l.b16 %v1114
        %v1179 = vunpack.c.l.b16 %v1115
        %v1180 = vunpack.c.l.b16 %v1116
        %v1181 = vunpack.c.l.b16 %v1117
        %v1182 = vunpack.c.l.b16 %v1118
        %v1183 = vunpack.c.l.b16 %v1119
        %v1184 = vunpack.c.l.b16 %v1120
        %v1185 = vunpack.c.l.b16 %v1121
        %v1186 = vunpack.c.l.b16 %v1122
        %v1187 = vunpack.c.l.b16 %v1123
        %v1188 = vunpack.c.l.b16 %v1124
        %v1189 = vunpack.c.l.b16 %v1125
        %v1190 = vunpack.c.l.b16 %v1126
        %v1191 = vunpack.c.l.b16 %v1127
        %v1192 = vunpack.c.l.b16 %v1128
        %v1193 = vunpack.c.l.b16 %v1129
        %v1194 = vunpack.c.l.b16 %v1130
        %v1195 = vpack.c.b16 %v1164, %v1163
        %v1196 = vpack.c.b16 %v1166, %v1165
        %v1197 = vpack.c.b16 %v1168, %v1167
        %v1198 = vpack.c.b16 %v1170, %v1169
        %v1199 = vpack.c.b16 %v1172, %v1171
        %v1200 = vpack.c.b16 %v1174, %v1173
        %v1201 = vpack.c.b16 %v1176, %v1175
        %v1202 = vpack.c.b16 %v1178, %v1177
        %v1203 = vpack.c.b16 %v1180, %v1179
        %v1204 = vpack.c.b16 %v1182, %v1181
        %v1205 = vpack.c.b16 %v1184, %v1183
        %v1206 = vpack.c.b16 %v1186, %v1185
        %v1207 = vpack.c.b16 %v1188, %v1187
        %v1208 = vpack.c.b16 %v1190, %v1189
        %v1209 = vpack.c.b16 %v1192, %v1191
        %v1210 = vpack.c.b16 %v1194, %v1193
        %1227 = vmatprep.subr.bf16.mxu0 0
        %1228 = vmatpush1.bf16.msra.mxu0 %v1202
        %1229 = vmatprep.subr.bf16.mxu0 0
        %1230 = vmatpush1.bf16.msra.mxu0 %v1201
        %1231 = vmatprep.subr.bf16.mxu0 0
        %1232 = vmatpush1.bf16.msra.mxu0 %v1200
        %1233 = vmatprep.subr.bf16.mxu0 0
        %1234 = vmatpush1.bf16.msra.mxu0 %v1199
        %1235 = vmatprep.subr.bf16.mxu0 0
        %1236 = vmatpush1.bf16.msra.mxu0 %v1198
        %1237 = vmatprep.subr.bf16.mxu0 0
        %1238 = vmatpush1.bf16.msra.mxu0 %v1197
        %1239 = vmatprep.subr.bf16.mxu0 0
        %1240 = vmatpush1.bf16.msra.mxu0 %v1196
        %1241 = vmatprep.subr.bf16.mxu0 0
        %1242 = vmatpush1.bf16.msra.mxu0 %v1195
        %1243 = vmatprep.subr.bf16.mxu0 0
        %1244 = vmatpush2.bf16.msra.mxu0 %v1210
        %1245 = vmatprep.subr.bf16.mxu0 0
        %1246 = vmatpush2.bf16.msra.mxu0 %v1209
        %1247 = vmatprep.subr.bf16.mxu0 0
        %1248 = vmatpush2.bf16.msra.mxu0 %v1208
        %1249 = vmatprep.subr.bf16.mxu0 0
        %1250 = vmatpush2.bf16.msra.mxu0 %v1207
        %1251 = vmatprep.subr.bf16.mxu0 0
        %1252 = vmatpush2.bf16.msra.mxu0 %v1206
        %1253 = vmatprep.subr.bf16.mxu0 0
        %1254 = vmatpush2.bf16.msra.mxu0 %v1205
        %1255 = vmatprep.subr.bf16.mxu0 0
        %1256 = vmatpush2.bf16.msra.mxu0 %v1204
        %1257 = vmatprep.subr.bf16.mxu0 0
        %1258 = vmatpush2.bf16.msra.mxu0 %v1203
        %1259 = vmatprep.mubr.bf16.mxu0 %v1084
        %1260 = vmatmul.mubr.bf16.gmra.mxu0 %v1083
        %v1261 = vpop.f32.mrf.mxu0
        %v1262 = vadd.f32 0.0, %v1261
        %v1263 = vpop.f32.mrf.mxu0
        %v1264 = vpop.f32.mrf.mxu0
        %v1265 = vadd.f32 0.0, %v1264
        %v1266 = vpop.f32.mrf.mxu0
        %1267 = vmatprep.mubr.bf16.mxu0 %v1086
        %1268 = vmatmul.mubr.bf16.gmra.mxu0 %v1085
        %v1269 = vpop.f32.mrf.mxu0
        %v1270 = vadd.f32 0.0, %v1269
        %v1271 = vpop.f32.mrf.mxu0
        %v1272 = vpop.f32.mrf.mxu0
        %v1273 = vadd.f32 0.0, %v1272
        %v1274 = vpop.f32.mrf.mxu0
        %1275 = vmatprep.mubr.bf16.mxu0 %v1088
        %1276 = vmatmul.mubr.bf16.gmra.mxu0 %v1087
        %v1277 = vpop.f32.mrf.mxu0
        %v1278 = vadd.f32 0.0, %v1277
        %v1279 = vpop.f32.mrf.mxu0
        %v1280 = vpop.f32.mrf.mxu0
        %v1281 = vadd.f32 0.0, %v1280
        %v1282 = vpop.f32.mrf.mxu0
        %1283 = vmatprep.mubr.bf16.mxu0 %v1090
        %1284 = vmatmul.mubr.bf16.gmra.mxu0 %v1089
        %v1285 = vpop.f32.mrf.mxu0
        %v1286 = vadd.f32 0.0, %v1285
        %v1287 = vpop.f32.mrf.mxu0
        %v1288 = vpop.f32.mrf.mxu0
        %v1289 = vadd.f32 0.0, %v1288
        %v1290 = vpop.f32.mrf.mxu0
        %1291 = vmatprep.mubr.bf16.mxu0 %v1092
        %1292 = vmatmul.mubr.bf16.gmra.mxu0 %v1091
        %v1293 = vpop.f32.mrf.mxu0
        %v1294 = vadd.f32 0.0, %v1293
        %v1295 = vpop.f32.mrf.mxu0
        %v1296 = vpop.f32.mrf.mxu0
        %v1297 = vadd.f32 0.0, %v1296
        %v1298 = vpop.f32.mrf.mxu0
        %1299 = vmatprep.mubr.bf16.mxu0 %v1094
        %1300 = vmatmul.mubr.bf16.gmra.mxu0 %v1093
        %v1301 = vpop.f32.mrf.mxu0
        %v1302 = vadd.f32 0.0, %v1301
        %v1303 = vpop.f32.mrf.mxu0
        %v1304 = vpop.f32.mrf.mxu0
        %v1305 = vadd.f32 0.0, %v1304
        %v1306 = vpop.f32.mrf.mxu0
        %1307 = vmatprep.mubr.bf16.mxu0 %v1096
        %1308 = vmatmul.mubr.bf16.gmra.mxu0 %v1095
        %v1309 = vpop.f32.mrf.mxu0
        %v1310 = vadd.f32 0.0, %v1309
        %v1311 = vpop.f32.mrf.mxu0
        %v1312 = vpop.f32.mrf.mxu0
        %v1313 = vadd.f32 0.0, %v1312
        %v1314 = vpop.f32.mrf.mxu0
        %1315 = vmatprep.mubr.bf16.mxu0 %v1098
        %1316 = vmatmul.mubr.bf16.gmra.mxu0 %v1097
        %v1317 = vpop.f32.mrf.mxu0
        %v1318 = vadd.f32 0.0, %v1317
        %v1319 = vpop.f32.mrf.mxu0
        %v1320 = vpop.f32.mrf.mxu0
        %v1321 = vadd.f32 0.0, %v1320
        %v1322 = vpop.f32.mrf.mxu0
        %1323 = vdwg.mxu0
        %v1324 = vadd.f32 %v385, %v1262
        %v1325 = vadd.f32 %v386, %v1265
        %v1326 = vadd.f32 %v387, %v1270
        %v1327 = vadd.f32 %v388, %v1273
        %v1328 = vadd.f32 %v389, %v1278
        %v1329 = vadd.f32 %v390, %v1281
        %v1330 = vadd.f32 %v391, %v1286
        %v1331 = vadd.f32 %v392, %v1289
        %v1332 = vadd.f32 %v393, %v1294
        %v1333 = vadd.f32 %v394, %v1297
        %v1334 = vadd.f32 %v395, %v1302
        %v1335 = vadd.f32 %v396, %v1305
        %v1336 = vadd.f32 %v397, %v1310
        %v1337 = vadd.f32 %v398, %v1313
        %v1338 = vadd.f32 %v399, %v1318
        %v1339 = vadd.f32 %v400, %v1321
        %1340 = vadd.xlane.f32.xlu0 %v1324
        %v1341 = vpop.xlane.xlu0 %1340
        %1342 = vadd.xlane.f32.xlu0 %v1325
        %v1343 = vpop.xlane.xlu0 %1342
        %1344 = vadd.xlane.f32.xlu0 %v1326
        %v1345 = vpop.xlane.xlu0 %1344
        %1346 = vadd.xlane.f32.xlu0 %v1327
        %v1347 = vpop.xlane.xlu0 %1346
        %1348 = vadd.xlane.f32.xlu0 %v1328
        %v1349 = vpop.xlane.xlu0 %1348
        %1350 = vadd.xlane.f32.xlu0 %v1329
        %v1351 = vpop.xlane.xlu0 %1350
        %1352 = vadd.xlane.f32.xlu0 %v1330
        %v1353 = vpop.xlane.xlu0 %1352
        %1354 = vadd.xlane.f32.xlu0 %v1331
        %v1355 = vpop.xlane.xlu0 %1354
        %1356 = vadd.xlane.f32.xlu0 %v1332
        %v1357 = vpop.xlane.xlu0 %1356
        %1358 = vadd.xlane.f32.xlu0 %v1333
        %v1359 = vpop.xlane.xlu0 %1358
        %1360 = vadd.xlane.f32.xlu0 %v1334
        %v1361 = vpop.xlane.xlu0 %1360
        %1362 = vadd.xlane.f32.xlu0 %v1335
        %v1363 = vpop.xlane.xlu0 %1362
        %1364 = vadd.xlane.f32.xlu0 %v1336
        %v1365 = vpop.xlane.xlu0 %1364
        %1366 = vadd.xlane.f32.xlu0 %v1337
        %v1367 = vpop.xlane.xlu0 %1366
        %1368 = vadd.xlane.f32.xlu0 %v1338
        %v1369 = vpop.xlane.xlu0 %1368
        %1370 = vadd.xlane.f32.xlu0 %v1339
        %v1371 = vpop.xlane.xlu0 %1370
        %v1372 = vrcp.pop 128.0
        %v1373 = vmul.f32 %v1341, %v1372
        %v1374 = vmul.f32 %v1343, %v1372
        %v1375 = vmul.f32 %v1345, %v1372
        %v1376 = vmul.f32 %v1347, %v1372
        %v1377 = vmul.f32 %v1349, %v1372
        %v1378 = vmul.f32 %v1351, %v1372
        %v1379 = vmul.f32 %v1353, %v1372
        %v1380 = vmul.f32 %v1355, %v1372
        %v1381 = vmul.f32 %v1357, %v1372
        %v1382 = vmul.f32 %v1359, %v1372
        %v1383 = vmul.f32 %v1361, %v1372
        %v1384 = vmul.f32 %v1363, %v1372
        %v1385 = vmul.f32 %v1365, %v1372
        %v1386 = vmul.f32 %v1367, %v1372
        %v1387 = vmul.f32 %v1369, %v1372
        %v1388 = vmul.f32 %v1371, %v1372
        %v1389 = vsub.f32 %v1324, %v1373
        %v1390 = vsub.f32 %v1325, %v1374
        %v1391 = vsub.f32 %v1326, %v1375
        %v1392 = vsub.f32 %v1327, %v1376
        %v1393 = vsub.f32 %v1328, %v1377
        %v1394 = vsub.f32 %v1329, %v1378
        %v1395 = vsub.f32 %v1330, %v1379
        %v1396 = vsub.f32 %v1331, %v1380
        %v1397 = vsub.f32 %v1332, %v1381
        %v1398 = vsub.f32 %v1333, %v1382
        %v1399 = vsub.f32 %v1334, %v1383
        %v1400 = vsub.f32 %v1335, %v1384
        %v1401 = vsub.f32 %v1336, %v1385
        %v1402 = vsub.f32 %v1337, %v1386
        %v1403 = vsub.f32 %v1338, %v1387
        %v1404 = vsub.f32 %v1339, %v1388
        %v1405 = vmul.f32 %v1389, %v1389
        %v1406 = vmul.f32 %v1390, %v1390
        %v1407 = vmul.f32 %v1391, %v1391
        %v1408 = vmul.f32 %v1392, %v1392
        %v1409 = vmul.f32 %v1393, %v1393
        %v1410 = vmul.f32 %v1394, %v1394
        %v1411 = vmul.f32 %v1395, %v1395
        %v1412 = vmul.f32 %v1396, %v1396
        %v1413 = vmul.f32 %v1397, %v1397
        %v1414 = vmul.f32 %v1398, %v1398
        %v1415 = vmul.f32 %v1399, %v1399
        %v1416 = vmul.f32 %v1400, %v1400
        %v1417 = vmul.f32 %v1401, %v1401
        %v1418 = vmul.f32 %v1402, %v1402
        %v1419 = vmul.f32 %v1403, %v1403
        %v1420 = vmul.f32 %v1404, %v1404
        %1421 = vadd.xlane.f32.xlu0 %v1405
        %v1422 = vpop.xlane.xlu0 %1421
        %1423 = vadd.xlane.f32.xlu0 %v1406
        %v1424 = vpop.xlane.xlu0 %1423
        %1425 = vadd.xlane.f32.xlu0 %v1407
        %v1426 = vpop.xlane.xlu0 %1425
        %1427 = vadd.xlane.f32.xlu0 %v1408
        %v1428 = vpop.xlane.xlu0 %1427
        %1429 = vadd.xlane.f32.xlu0 %v1409
        %v1430 = vpop.xlane.xlu0 %1429
        %1431 = vadd.xlane.f32.xlu0 %v1410
        %v1432 = vpop.xlane.xlu0 %1431
        %1433 = vadd.xlane.f32.xlu0 %v1411
        %v1434 = vpop.xlane.xlu0 %1433
        %1435 = vadd.xlane.f32.xlu0 %v1412
        %v1436 = vpop.xlane.xlu0 %1435
        %1437 = vadd.xlane.f32.xlu0 %v1413
        %v1438 = vpop.xlane.xlu0 %1437
        %1439 = vadd.xlane.f32.xlu0 %v1414
        %v1440 = vpop.xlane.xlu0 %1439
        %1441 = vadd.xlane.f32.xlu0 %v1415
        %v1442 = vpop.xlane.xlu0 %1441
        %1443 = vadd.xlane.f32.xlu0 %v1416
        %v1444 = vpop.xlane.xlu0 %1443
        %1445 = vadd.xlane.f32.xlu0 %v1417
        %v1446 = vpop.xlane.xlu0 %1445
        %1447 = vadd.xlane.f32.xlu0 %v1418
        %v1448 = vpop.xlane.xlu0 %1447
        %1449 = vadd.xlane.f32.xlu0 %v1419
        %v1450 = vpop.xlane.xlu0 %1449
        %1451 = vadd.xlane.f32.xlu0 %v1420
        %v1452 = vpop.xlane.xlu0 %1451
        %v1453 = vmul.f32 %v1422, %v1372
        %v1454 = vmul.f32 %v1424, %v1372
        %v1455 = vmul.f32 %v1426, %v1372
        %v1456 = vmul.f32 %v1428, %v1372
        %v1457 = vmul.f32 %v1430, %v1372
        %v1458 = vmul.f32 %v1432, %v1372
        %v1459 = vmul.f32 %v1434, %v1372
        %v1460 = vmul.f32 %v1436, %v1372
        %v1461 = vmul.f32 %v1438, %v1372
        %v1462 = vmul.f32 %v1440, %v1372
        %v1463 = vmul.f32 %v1442, %v1372
        %v1464 = vmul.f32 %v1444, %v1372
        %v1465 = vmul.f32 %v1446, %v1372
        %v1466 = vmul.f32 %v1448, %v1372
        %v1467 = vmul.f32 %v1450, %v1372
        %v1468 = vmul.f32 %v1452, %v1372
        %v1469 = vadd.f32 %v1453, 1e-05
        %v1470 = vadd.f32 %v1454, 1e-05
        %v1471 = vadd.f32 %v1455, 1e-05
        %v1472 = vadd.f32 %v1456, 1e-05
        %v1473 = vadd.f32 %v1457, 1e-05
        %v1474 = vadd.f32 %v1458, 1e-05
        %v1475 = vadd.f32 %v1459, 1e-05
        %v1476 = vadd.f32 %v1460, 1e-05
        %v1477 = vadd.f32 %v1461, 1e-05
        %v1478 = vadd.f32 %v1462, 1e-05
        %v1479 = vadd.f32 %v1463, 1e-05
        %v1480 = vadd.f32 %v1464, 1e-05
        %v1481 = vadd.f32 %v1465, 1e-05
        %v1482 = vadd.f32 %v1466, 1e-05
        %v1483 = vadd.f32 %v1467, 1e-05
        %v1484 = vadd.f32 %v1468, 1e-05
        %v1485 = vrsqrt.pop %v1469
        %v1486 = vrsqrt.pop %v1470
        %v1487 = vrsqrt.pop %v1471
        %v1488 = vrsqrt.pop %v1472
        %v1489 = vrsqrt.pop %v1473
        %v1490 = vrsqrt.pop %v1474
        %v1491 = vrsqrt.pop %v1475
        %v1492 = vrsqrt.pop %v1476
        %v1493 = vrsqrt.pop %v1477
        %v1494 = vrsqrt.pop %v1478
        %v1495 = vrsqrt.pop %v1479
        %v1496 = vrsqrt.pop %v1480
        %v1497 = vrsqrt.pop %v1481
        %v1498 = vrsqrt.pop %v1482
        %v1499 = vrsqrt.pop %v1483
        %v1500 = vrsqrt.pop %v1484
        %v1501 = vmul.f32 %v1389, %v1485
        %v1502 = vmul.f32 %v1390, %v1486
        %v1503 = vmul.f32 %v1391, %v1487
        %v1504 = vmul.f32 %v1392, %v1488
        %v1505 = vmul.f32 %v1393, %v1489
        %v1506 = vmul.f32 %v1394, %v1490
        %v1507 = vmul.f32 %v1395, %v1491
        %v1508 = vmul.f32 %v1396, %v1492
        %v1509 = vmul.f32 %v1397, %v1493
        %v1510 = vmul.f32 %v1398, %v1494
        %v1511 = vmul.f32 %v1399, %v1495
        %v1512 = vmul.f32 %v1400, %v1496
        %v1513 = vmul.f32 %v1401, %v1497
        %v1514 = vmul.f32 %v1402, %v1498
        %v1515 = vmul.f32 %v1403, %v1499
        %v1516 = vmul.f32 %v1404, %v1500
        %v1517 = vld [vmem:[%s4] sm:$0x1]
        %v1519 = vlaneseq
        %v1520 = vshrl.u32 %v1519, 7
        %v1521 = vsub.s32 0, %v1520
        %v1522 = vrot.slane %v1517, %v1521
        %v1524 = vmul.f32 %v1501, %v1522
        %v1525 = vmul.f32 %v1502, %v1522
        %v1526 = vmul.f32 %v1503, %v1522
        %v1527 = vmul.f32 %v1504, %v1522
        %v1528 = vmul.f32 %v1505, %v1522
        %v1529 = vmul.f32 %v1506, %v1522
        %v1530 = vmul.f32 %v1507, %v1522
        %v1531 = vmul.f32 %v1508, %v1522
        %v1532 = vmul.f32 %v1509, %v1522
        %v1533 = vmul.f32 %v1510, %v1522
        %v1534 = vmul.f32 %v1511, %v1522
        %v1535 = vmul.f32 %v1512, %v1522
        %v1536 = vmul.f32 %v1513, %v1522
        %v1537 = vmul.f32 %v1514, %v1522
        %v1538 = vmul.f32 %v1515, %v1522
        %v1539 = vmul.f32 %v1516, %v1522
        %v1540 = vld [vmem:[%s5] sm:$0x1]
        %v1542 = vlaneseq
        %v1543 = vshrl.u32 %v1542, 7
        %v1544 = vsub.s32 0, %v1543
        %v1545 = vrot.slane %v1540, %v1544
        %v1547 = vadd.f32 %v1524, %v1545
        %v1548 = vadd.f32 %v1525, %v1545
        %v1549 = vadd.f32 %v1526, %v1545
        %v1550 = vadd.f32 %v1527, %v1545
        %v1551 = vadd.f32 %v1528, %v1545
        %v1552 = vadd.f32 %v1529, %v1545
        %v1553 = vadd.f32 %v1530, %v1545
        %v1554 = vadd.f32 %v1531, %v1545
        %v1555 = vadd.f32 %v1532, %v1545
        %v1556 = vadd.f32 %v1533, %v1545
        %v1557 = vadd.f32 %v1534, %v1545
        %v1558 = vadd.f32 %v1535, %v1545
        %v1559 = vadd.f32 %v1536, %v1545
        %v1560 = vadd.f32 %v1537, %v1545
        %v1561 = vadd.f32 %v1538, %v1545
        %v1562 = vadd.f32 %v1539, %v1545
        %v1563 = vpack.c.bf16 %v1548, %v1547
        %v1564 = vpack.c.bf16 %v1550, %v1549
        %v1565 = vpack.c.bf16 %v1552, %v1551
        %v1566 = vpack.c.bf16 %v1554, %v1553
        %v1567 = vpack.c.bf16 %v1556, %v1555
        %v1568 = vpack.c.bf16 %v1558, %v1557
        %v1569 = vpack.c.bf16 %v1560, %v1559
        %v1570 = vpack.c.bf16 %v1562, %v1561
        %v1571 = vld [vmem:[#allocation10] sm:$0xf]
        %v1572 = vld [vmem:[#allocation10 + $0x4] sm:$0xf]
        %v1573 = vld [vmem:[#allocation10 + $0x8] sm:$0xf]
        %v1574 = vld [vmem:[#allocation10 + $0xc] sm:$0xf]
        %v1575 = vld [vmem:[#allocation10 + $0x10] sm:$0xf]
        %v1576 = vld [vmem:[#allocation10 + $0x14] sm:$0xf]
        %v1577 = vld [vmem:[#allocation10 + $0x18] sm:$0xf]
        %v1578 = vld [vmem:[#allocation10 + $0x1c] sm:$0xf]
        %v1579 = vld [vmem:[#allocation10 + $0x20] sm:$0xf]
        %v1580 = vld [vmem:[#allocation10 + $0x24] sm:$0xf]
        %v1581 = vld [vmem:[#allocation10 + $0x28] sm:$0xf]
        %v1582 = vld [vmem:[#allocation10 + $0x2c] sm:$0xf]
        %v1583 = vld [vmem:[#allocation10 + $0x30] sm:$0xf]
        %v1584 = vld [vmem:[#allocation10 + $0x34] sm:$0xf]
        %v1585 = vld [vmem:[#allocation10 + $0x38] sm:$0xf]
        %v1586 = vld [vmem:[#allocation10 + $0x3c] sm:$0xf]
        %v1587 = vld [vmem:[%s7] sm:$0x1]
        %v1589 = vlaneseq
        %v1590 = vshrl.u32 %v1589, 7
        %v1591 = vsub.s32 0, %v1590
        %v1592 = vrot.slane %v1587, %v1591
        %v1610 = vunpack.c.l.b16 %v1571
        %v1611 = vunpack.c.l.b16 %v1572
        %v1612 = vunpack.c.l.b16 %v1573
        %v1613 = vunpack.c.l.b16 %v1574
        %v1614 = vunpack.c.l.b16 %v1575
        %v1615 = vunpack.c.l.b16 %v1576
        %v1616 = vunpack.c.l.b16 %v1577
        %v1617 = vunpack.c.l.b16 %v1578
        %v1618 = vunpack.c.l.b16 %v1579
        %v1619 = vunpack.c.l.b16 %v1580
        %v1620 = vunpack.c.l.b16 %v1581
        %v1621 = vunpack.c.l.b16 %v1582
        %v1622 = vunpack.c.l.b16 %v1583
        %v1623 = vunpack.c.l.b16 %v1584
        %v1624 = vunpack.c.l.b16 %v1585
        %v1625 = vunpack.c.l.b16 %v1586
        %v1626 = vpack.c.b16 %v1611, %v1610
        %v1627 = vpack.c.b16 %v1613, %v1612
        %v1628 = vpack.c.b16 %v1615, %v1614
        %v1629 = vpack.c.b16 %v1617, %v1616
        %v1630 = vpack.c.b16 %v1619, %v1618
        %v1631 = vpack.c.b16 %v1621, %v1620
        %v1632 = vpack.c.b16 %v1623, %v1622
        %v1633 = vpack.c.b16 %v1625, %v1624
        %1642 = vmatprep.subr.bf16.mxu0 0
        %1643 = vmatpush1.bf16.msra.mxu0 %v1633
        %1644 = vmatprep.subr.bf16.mxu0 0
        %1645 = vmatpush1.bf16.msra.mxu0 %v1632
        %1646 = vmatprep.subr.bf16.mxu0 0
        %1647 = vmatpush1.bf16.msra.mxu0 %v1631
        %1648 = vmatprep.subr.bf16.mxu0 0
        %1649 = vmatpush1.bf16.msra.mxu0 %v1630
        %1650 = vmatprep.subr.bf16.mxu0 0
        %1651 = vmatpush1.bf16.msra.mxu0 %v1629
        %1652 = vmatprep.subr.bf16.mxu0 0
        %1653 = vmatpush1.bf16.msra.mxu0 %v1628
        %1654 = vmatprep.subr.bf16.mxu0 0
        %1655 = vmatpush1.bf16.msra.mxu0 %v1627
        %1656 = vmatprep.subr.bf16.mxu0 0
        %1657 = vmatpush1.bf16.msra.mxu0 %v1626
        %1658 = vmatprep.subr.bf16.mxu0 0
        %1659 = vmatpush2.bf16.msra.mxu0 0
        %1660 = vmatprep.subr.bf16.mxu0 0
        %1661 = vmatpush2.bf16.msra.mxu0 0
        %1662 = vmatprep.subr.bf16.mxu0 0
        %1663 = vmatpush2.bf16.msra.mxu0 0
        %1664 = vmatprep.subr.bf16.mxu0 0
        %1665 = vmatpush2.bf16.msra.mxu0 0
        %1666 = vmatprep.subr.bf16.mxu0 0
        %1667 = vmatpush2.bf16.msra.mxu0 0
        %1668 = vmatprep.subr.bf16.mxu0 0
        %1669 = vmatpush2.bf16.msra.mxu0 0
        %1670 = vmatprep.subr.bf16.mxu0 0
        %1671 = vmatpush2.bf16.msra.mxu0 0
        %1672 = vmatprep.subr.bf16.mxu0 0
        %1673 = vmatpush2.bf16.msra.mxu0 0
        %1674 = vmatprep.mubr.bf16.mxu0 0
        %1675 = vmatmul.mubr.bf16.gmra.mxu0 %v1563
        %v1676 = vpop.f32.mrf.mxu0
        %v1677 = vadd.f32 %v1592, %v1676
        %v1678 = vpop.f32.mrf.mxu0
        %v1679 = vpop.f32.mrf.mxu0
        %v1680 = vadd.f32 %v1592, %v1679
        %v1681 = vpop.f32.mrf.mxu0
        %1682 = vmatprep.mubr.bf16.mxu0 0
        %1683 = vmatmul.mubr.bf16.gmra.mxu0 %v1564
        %v1684 = vpop.f32.mrf.mxu0
        %v1685 = vadd.f32 %v1592, %v1684
        %v1686 = vpop.f32.mrf.mxu0
        %v1687 = vpop.f32.mrf.mxu0
        %v1688 = vadd.f32 %v1592, %v1687
        %v1689 = vpop.f32.mrf.mxu0
        %1690 = vmatprep.mubr.bf16.mxu0 0
        %1691 = vmatmul.mubr.bf16.gmra.mxu0 %v1565
        %v1692 = vpop.f32.mrf.mxu0
        %v1693 = vadd.f32 %v1592, %v1692
        %v1694 = vpop.f32.mrf.mxu0
        %v1695 = vpop.f32.mrf.mxu0
        %v1696 = vadd.f32 %v1592, %v1695
        %v1697 = vpop.f32.mrf.mxu0
        %1698 = vmatprep.mubr.bf16.mxu0 0
        %1699 = vmatmul.mubr.bf16.gmra.mxu0 %v1566
        %v1700 = vpop.f32.mrf.mxu0
        %v1701 = vadd.f32 %v1592, %v1700
        %v1702 = vpop.f32.mrf.mxu0
        %v1703 = vpop.f32.mrf.mxu0
        %v1704 = vadd.f32 %v1592, %v1703
        %v1705 = vpop.f32.mrf.mxu0
        %1706 = vmatprep.mubr.bf16.mxu0 0
        %1707 = vmatmul.mubr.bf16.gmra.mxu0 %v1567
        %v1708 = vpop.f32.mrf.mxu0
        %v1709 = vadd.f32 %v1592, %v1708
        %v1710 = vpop.f32.mrf.mxu0
        %v1711 = vpop.f32.mrf.mxu0
        %v1712 = vadd.f32 %v1592, %v1711
        %v1713 = vpop.f32.mrf.mxu0
        %1714 = vmatprep.mubr.bf16.mxu0 0
        %1715 = vmatmul.mubr.bf16.gmra.mxu0 %v1568
        %v1716 = vpop.f32.mrf.mxu0
        %v1717 = vadd.f32 %v1592, %v1716
        %v1718 = vpop.f32.mrf.mxu0
        %v1719 = vpop.f32.mrf.mxu0
        %v1720 = vadd.f32 %v1592, %v1719
        %v1721 = vpop.f32.mrf.mxu0
        %1722 = vmatprep.mubr.bf16.mxu0 0
        %1723 = vmatmul.mubr.bf16.gmra.mxu0 %v1569
        %v1724 = vpop.f32.mrf.mxu0
        %v1725 = vadd.f32 %v1592, %v1724
        %v1726 = vpop.f32.mrf.mxu0
        %v1727 = vpop.f32.mrf.mxu0
        %v1728 = vadd.f32 %v1592, %v1727
        %v1729 = vpop.f32.mrf.mxu0
        %1730 = vmatprep.mubr.bf16.mxu0 0
        %1731 = vmatmul.mubr.bf16.gmra.mxu0 %v1570
        %v1732 = vpop.f32.mrf.mxu0
        %v1733 = vadd.f32 %v1592, %v1732
        %v1734 = vpop.f32.mrf.mxu0
        %v1735 = vpop.f32.mrf.mxu0
        %v1736 = vadd.f32 %v1592, %v1735
        %v1737 = vpop.f32.mrf.mxu0
        %1738 = vdwg.mxu0
        %1739 = vst [vmem:[%s381] sm:$0xff] %v1677
        %1740 = vst [vmem:[%s381 + $0x8] sm:$0xff] %v1680
        %1741 = vst [vmem:[%s381 + $0x10] sm:$0xff] %v1685
        %1742 = vst [vmem:[%s381 + $0x18] sm:$0xff] %v1688
        %1743 = vst [vmem:[%s381 + $0x20] sm:$0xff] %v1693
        %1744 = vst [vmem:[%s381 + $0x28] sm:$0xff] %v1696
        %1745 = vst [vmem:[%s381 + $0x30] sm:$0xff] %v1701
        %1746 = vst [vmem:[%s381 + $0x38] sm:$0xff] %v1704
        %1747 = vst [vmem:[%s381 + $0x40] sm:$0xff] %v1709
        %1748 = vst [vmem:[%s381 + $0x48] sm:$0xff] %v1712
        %1749 = vst [vmem:[%s381 + $0x50] sm:$0xff] %v1717
        %1750 = vst [vmem:[%s381 + $0x58] sm:$0xff] %v1720
        %1751 = vst [vmem:[%s381 + $0x60] sm:$0xff] %v1725
        %1752 = vst [vmem:[%s381 + $0x68] sm:$0xff] %v1728
        %1753 = vst [vmem:[%s381 + $0x70] sm:$0xff] %v1733
        %1754 = vst [vmem:[%s381 + $0x78] sm:$0xff] %v1736
        %s1755 = sand.u32 %s208, 1
        %s1756 = scalar_lea.sflag [#allocation4], %s1755
        %s1757 = sand.u32 %s208, 1
        %s1758 = smul.addr %s1757, 128
        %s1759 = scalar_lea.vmem [#allocation11], %s1758
        // Predicated region
        $region73: #{tpu_custom_call.1} parent=51 // pred_check
          %p1760 = pneg %p218
        $region74: #{tpu_custom_call.1} parent=51 // pred_check_branch
          %1762 = sbr.rel (%p1760) target = $region76
        $region75: #{tpu_custom_call.1} parent=51 // pred_region
          %s1763 = smul.u32 16, %s27
          %s1765 = ssub.s32 2048, 2048
          %1766 = vsyncadd %s1756, %s1765
          %s1767 = smul.addr %s1763, 128
          %s1768 = scalar_lea.hbm %s8, %s1767
          %s1769 = sshll.u32 %s1759, 4
          %s1770 = int_to_ptr.vmem [resolvable:$true] %s1769
          %1775 = dma.vmem_to_hbm [thread:$0]  %s1770, 2048, %s1768, %s1756, 128, 128, 8
        $region76: #{tpu_custom_call.1} parent=51 // pred_fallthru
          _
      $region52: #{tpu_custom_call.1} parent=5 // pred_fallthru
        _
      %p1776 = scmp.le.s32.totalorder 2, %s22
      // Predicated region
      $region77: #{tpu_custom_call.1} parent=5 // pred_check
        %p1777 = pneg %p1776
      $region78: #{tpu_custom_call.1} parent=5 // pred_check_branch
        %1779 = sbr.rel (%p1777) target = $region80
      $region79: #{tpu_custom_call.1} parent=5 // pred_region
        %s1780 = ssub.s32 %s22, 2
        // Predicated region
        $region81: #{tpu_custom_call.1} parent=79 // pred_check
          %p1781 = pneg %p224
        $region82: #{tpu_custom_call.1} parent=79 // pred_check_branch
          %1783 = sbr.rel (%p1781) target = $region84
        $region83: #{tpu_custom_call.1} parent=79 // pred_region
          %s1784 = sand.u32 %s209, 1
          %s1785 = scalar_lea.sflag [#allocation4], %s1784
          %s1786 = sand.u32 %s209, 1
          %s1787 = smul.addr %s1786, 128
          %s1788 = scalar_lea.vmem [#allocation11], %s1787
          %1789 = dma.done %s1785, 2048
        $region84: #{tpu_custom_call.1} parent=79 // pred_fallthru
          _
      $region80: #{tpu_custom_call.1} parent=5 // pred_fallthru
        _
    $region6: #{tpu_custom_call.1} parent=1 // loop_footer
      %s26 = sadd.s32 1, %s22
    $region7: #{tpu_custom_call.1} parent=1 // loop_footer_branch
      %21 = sbr.rel target = $region3
    $region8: #{tpu_custom_call.1} parent=1 // loop_exit
      _
    %1790 = vsyncpa [#allocation3], 1
    %s1791 = scalar_lea.sflag [#allocation3], 1
    %1792 = vsyncpa %s1791, 1
    %1793 = vsyncpa [#allocation6], 1
    %1794 = vsyncpa [#allocation9], 1
    %1795 = vsyncpa [#allocation4], 1
    %s1796 = scalar_lea.sflag [#allocation4], 1
    %1797 = vsyncpa %s1796, 1

</llo_original>
